<compile_context>
chip_gen: v5e
topology: v5e:2x2
jax: 0.10.0
libtpu: 0.0.40
codegen_flags: <defaults>
</compile_context>

<pallas_src>
import functools

import jax
import jax.numpy as jnp
from jax import lax
from jax.experimental import pallas as pl
from jax.experimental.pallas import tpu as pltpu


# --------------------------------- helpers ----------------------------------
def _bmm(a, b, ca, cb):
    """Batched matmul (batch dim 0) with explicit contracting dims, f32 acc."""
    return lax.dot_general(a, b, dimension_numbers=((ca, cb), ((0,), (0,))),
                           preferred_element_type=jnp.float32)


def _softmax_last(x):
    m = jnp.max(x, axis=-1, keepdims=True)
    e = jnp.exp(x - m)
    # divide -> EUP reciprocal (free slot) instead of a VPU divide.
    return e * pl.reciprocal(jnp.sum(e, axis=-1, keepdims=True), approx=True)


def _round_up(n, m):
    return ((n + m - 1) // m) * m


# ------------------------------ fused SSA kernel ------------------------------
def _sada_ssa_kernel(x_ref, wqkv_ref, bqkv_ref, w3_ref, b3_ref, o_ref, *,
                     block_b, n_segment, channels, pixels):
    f32 = jnp.float32
    bf16 = jnp.bfloat16
    Bb, T, C, HW = block_b, n_segment, channels, pixels
    BT = Bb * T
    scale = C ** (-0.5)

    xb = x_ref[...].reshape(BT, C, HW)              # native layout, lane = HW
    wqkv = wqkv_ref[...]                            # (3, C, C)  [q/k/v, out, in]
    bqkv = bqkv_ref[...]                            # (3, C, 1)
    w3 = w3_ref[...]                                # (2, 3, C, C) [tq/tk, tap, out, in]
    b3 = b3_ref[...]                                # (2, C, 1)

    def cmix(w2d, operand, bias=None):
        # per-sample (C_out, C_in) @ (C_in, HW) as a weight-broadcast batched matmul
        wb = jnp.broadcast_to(w2d, (BT, C, C))
        y = _bmm(wb, operand, (2,), (1,))           # (BT, C, HW)
        if bias is not None:
            y = y + bias                            # (C, 1) broadcast over lanes
        return y

    # ---- to_qkv 1x1 conv; weights pre-split => no unaligned slicing.
    q = cmix(wqkv[0], xb, bqkv[0]) * scale          # scale folded into q once
    k = cmix(wqkv[1], xb, bqkv[1])
    v = cmix(wqkv[2], xb, bqkv[2])
    qb, kb, vb = q.astype(bf16), k.astype(bf16), v.astype(bf16)

    # ---- pixel (spatial) attention: contract over channels (transposed lhs).
    pdots = _bmm(qb, kb, (1,), (1,))                # (BT, HW, HW)
    pattn = _softmax_last(pdots).astype(bf16)
    pix = _bmm(vb, pattn, (2,), (2,))               # (BT, C, HW)

    # ---- channel attention: contract over pixels.
    cdots = _bmm(qb, kb, (2,), (2,))                # (BT, C, C)
    cattn = _softmax_last(cdots).astype(bf16)
    chan = _bmm(cattn, vb, (2,), (1,))              # (BT, C, HW)

    x_hat = pix + chan                              # (BT, C, HW) f32
    x_hat4 = x_hat.reshape(Bb, T, C, HW)

    # ---- temporal Conv3d kernel (3,1,1), padding (1,0,0): shifted operands
    # built with outer-axis concatenation (no scratch round trip).
    if T > 1:
        zrow = jnp.zeros((Bb, 1, C, HW), dtype=f32)
        x_prev = jnp.concatenate([zrow, x_hat4[:, :T - 1]], axis=1).reshape(BT, C, HW)
        x_next = jnp.concatenate([x_hat4[:, 1:], zrow], axis=1).reshape(BT, C, HW)
    else:
        x_prev = jnp.zeros_like(x_hat)
        x_next = jnp.zeros_like(x_hat)

    def tconv(half):
        y = cmix(w3[half, 1], x_hat, b3[half])      # center tap + bias
        y = y + cmix(w3[half, 0], x_prev)           # tap 0 <-> x_hat[t-1]
        y = y + cmix(w3[half, 2], x_next)           # tap 2 <-> x_hat[t+1]
        return y.reshape(Bb, T, C, HW)

    tq4 = tconv(0)
    tk4 = tconv(1)
    v4 = v.reshape(Bb, T, C, HW)

    # ---- temporal attention, fused (T = n_segment is small): unrolled loop,
    # contraction over (C, HW) via elementwise multiply + reduce.
    for kk in range(T):
        prod = tq4[:, kk:kk + 1] * tk4                                  # (Bb, T, C, HW)
        dk = jnp.sum(jnp.sum(prod, axis=3, keepdims=True),
                     axis=2, keepdims=True)                             # (Bb, T, 1, 1)
        m = jnp.max(dk, axis=1, keepdims=True)
        e = jnp.exp(dk - m)
        attn = e * pl.reciprocal(jnp.sum(e, axis=1, keepdims=True), approx=True)
        o_ref[:, kk:kk + 1, :, :] = jnp.sum(attn * v4, axis=1, keepdims=True)


# ------------------------- VMEM-aware block selection -------------------------
def _vmem_limit_bytes():
    cap = 128 * 1024 * 1024
    try:
        info = pltpu.get_tpu_info()
        c = int(getattr(info, "vmem_capacity_bytes", 0) or 0)
        if c > 0:
            cap = c
    except Exception:
        pass
    return min(int(cap * 0.75), 100 * 1024 * 1024)


def _pick_block_b(B, T, C, HW, limit_bytes):
    """Largest divisor of B (preferring >= 2 grid steps) whose per-step
    footprint (double-buffered in/out blocks, broadcast weights, attention
    temporaries) fits within ~half the scoped VMEM limit."""
    Cs, Cl = _round_up(C, 8), _round_up(C, 128)
    HWs, HWl = _round_up(HW, 8), _round_up(HW, 128)
    budget = limit_bytes // 2

    def est_bytes(bb):
        bt = bb * T
        feat = bt * Cs * HWl                      # one (BbT, C, HW) f32 tile
        n_feat = (2 * 2                           # x in + out, double buffered
                  + 3 + 1.5                       # q, k, v + bf16 copies
                  + 4                             # x_hat, x_prev, x_next, v4
                  + 2 + 2)                        # tq, tk + temporal-loop temps
        pix = 2.5 * bt * HWs * HWl                # pixel dots + attn (f32 + bf16)
        chan = 2.5 * bt * Cs * Cl                 # channel dots + attn
        wts = 9.0 * bt * Cs * Cl + 12 * Cs * Cl   # broadcast weights + params
        return int(4 * (n_feat * feat + pix + chan + wts) * 1.25)

    divisors = [bb for bb in range(1, B + 1) if B % bb == 0]
    preferred = [bb for bb in divisors if B // bb >= 2] or divisors
    fitting = [bb for bb in preferred if est_bytes(bb) <= budget]
    return max(fitting) if fitting else 1


# ------------------------------- host wrappers --------------------------------
def ssa_forward(x4, params, n_segment):
    """x4: (BT, C, H, W) f32 -> (BT, C, H, W). BT must be divisible by n_segment."""
    wqkv, bqkv, w3, b3 = params
    BT, C, H, W = x4.shape
    T = n_segment
    assert BT % T == 0, "bt must be divisible by n_segment"
    B = BT // T
    HW = H * W

    limit = _vmem_limit_bytes()
    Bb = _pick_block_b(B, T, C, HW, limit)

    xk = x4.reshape(B, T, C, HW)          # pure reshape: native layout, no transpose

    kern = functools.partial(_sada_ssa_kernel, block_b=Bb, n_segment=T,
                             channels=C, pixels=HW)
    out = pl.pallas_call(
        kern,
        out_shape=jax.ShapeDtypeStruct((B, T, C, HW), jnp.float32),
        grid_spec=pltpu.PrefetchScalarGridSpec(
            num_scalar_prefetch=0,
            grid=(B // Bb,),
            in_specs=[
                pl.BlockSpec((Bb, T, C, HW), lambda b: (b, 0, 0, 0)),
                pl.BlockSpec((3, C, C), lambda b: (0, 0, 0)),
                pl.BlockSpec((3, C, 1), lambda b: (0, 0, 0)),
                pl.BlockSpec((2, 3, C, C), lambda b: (0, 0, 0, 0)),
                pl.BlockSpec((2, C, 1), lambda b: (0, 0, 0)),
            ],
            out_specs=pl.BlockSpec((Bb, T, C, HW), lambda b: (b, 0, 0, 0)),
        ),
        compiler_params=pltpu.CompilerParams(
            dimension_semantics=("parallel",),
            vmem_limit_bytes=limit),
    )(xk, wqkv, bqkv, w3, b3)

    return out.reshape(BT, C, H, W)       # pure reshape back, no transpose


def sada_forward(x, params, n_segment):
    """x: (n, c, d, w, h) float32 — mirrors SADA_Attention.forward exactly."""
    n, c, d, w, h = x.shape
    # branch 0: LF0 over (w, h) planes, time axis = d
    lx = jnp.transpose(x, (0, 2, 1, 3, 4)).reshape(n * d, c, w, h)
    lx = ssa_forward(lx, params["LF0"], n_segment)
    x0 = jnp.transpose(lx, (0, 2, 1, 3)).reshape(n, c, d, w, h)
    # branch 1: LF1 over (d, h) planes, "time" axis = w
    lx = jnp.transpose(x, (0, 3, 1, 2, 4)).reshape(n * w, c, d, h)
    lx = ssa_forward(lx, params["LF1"], n_segment)
    x1 = jnp.transpose(lx.reshape(n, w, c, d, h), (0, 2, 3, 1, 4))
    # branch 2: LF2 over (d, w) planes, "time" axis = h
    lx = jnp.transpose(x, (0, 4, 1, 2, 3)).reshape(n * h, c, d, w)
    lx = ssa_forward(lx, params["LF2"], n_segment)
    x2 = jnp.transpose(lx.reshape(n, h, c, d, w), (0, 2, 3, 4, 1))
    return x0 + x1 + x2


# ----------------------- pure-JAX reference (for checking) -----------------------
def ssa_reference(x4, params, t):
    wqkv, bqkv, w3, b3 = params
    BT, C, H, W = x4.shape
    B = BT // t
    HW = H * W
    scale = C ** (-0.5)
    xf = x4.reshape(BT, C, HW).transpose(0, 2, 1)               # (BT, HW, C)
    q = jnp.einsum('bpc,oc->bpo', xf, wqkv[0]) + bqkv[0, :, 0]
    k = jnp.einsum('bpc,oc->bpo', xf, wqkv[1]) + bqkv[1, :, 0]
    v = jnp.einsum('bpc,oc->bpo', xf, wqkv[2]) + bqkv[2, :, 0]
    pd = jnp.einsum('bic,bjc->bij', q, k) * scale
    po = jnp.einsum('bij,bjc->bic', jax.nn.softmax(pd, -1), v)
    cd = jnp.einsum('bic,bik->bck', q, k) * scale
    co = jnp.einsum('bij,bdj->bdi', jax.nn.softmax(cd, -1), v)
    xh = (po + co).reshape(B, t, HW, C)
    xp = jnp.pad(xh, ((0, 0), (1, 1), (0, 0), (0, 0)))
    tq = b3[0, :, 0] + sum(jnp.einsum('btpc,oc->btpo', xp[:, dt:dt + t], w3[0, dt])
                           for dt in range(3))
    tk = b3[1, :, 0] + sum(jnp.einsum('btpc,oc->btpo', xp[:, dt:dt + t], w3[1, dt])
                           for dt in range(3))
    td = jnp.einsum('bipc,bjpc->bij', tq, tk)
    ta = jax.nn.softmax(td, -1)
    v3 = v.reshape(B, t, HW, C)
    out = jnp.einsum('bkt,btpc->bkpc', ta, v3)
    return out.transpose(0, 1, 3, 2).reshape(BT, C, H, W)


def sada_reference(x, params, n_segment):
    n, c, d, w, h = x.shape
    with jax.default_matmul_precision("float32"):
        lx = jnp.transpose(x, (0, 2, 1, 3, 4)).reshape(n * d, c, w, h)
        lx = ssa_reference(lx, params["LF0"], n_segment)
        x0 = jnp.transpose(lx, (0, 2, 1, 3)).reshape(n, c, d, w, h)
        lx = jnp.transpose(x, (0, 3, 1, 2, 4)).reshape(n * w, c, d, h)
        lx = ssa_reference(lx, params["LF1"], n_segment)
        x1 = jnp.transpose(lx.reshape(n, w, c, d, h), (0, 2, 3, 1, 4))
        lx = jnp.transpose(x, (0, 4, 1, 2, 3)).reshape(n * h, c, d, w)
        lx = ssa_reference(lx, params["LF2"], n_segment)
        x2 = jnp.transpose(lx.reshape(n, h, c, d, w), (0, 2, 3, 4, 1))
        return x0 + x1 + x2


# ----------------------- parameter init (deterministic) -----------------------
def init_ssa_params(key, C):
    k1, k2, k3, k4 = jax.random.split(key, 4)
    wqkv = 0.1 * jax.random.normal(k1, (3, C, C), jnp.float32)     # [q/k/v][out][in]
    bqkv = 0.1 * jax.random.normal(k2, (3, C, 1), jnp.float32)
    w3 = 0.1 * jax.random.normal(k3, (2, 3, C, C), jnp.float32)    # [tq/tk][tap][out][in]
    b3 = 0.1 * jax.random.normal(k4, (2, C, 1), jnp.float32)
    return (wqkv, bqkv, w3, b3)


if __name__ == "__main__":
    N, C, D, W, H = 2, 4, 4, 4, 4   # x: (n, c, d, w, h) as in the PyTorch forward
    n_segment = 4                   # must divide n*d, n*w, n*h

    key = jax.random.PRNGKey(0)
    kx, k0, k1, k2 = jax.random.split(key, 4)
    x = jax.random.normal(kx, (N, C, D, W, H), jnp.float32)
    params = {
        "LF0": init_ssa_params(k0, C),
        "LF1": init_ssa_params(k1, C),
        "LF2": init_ssa_params(k2, C),
    }

    fwd = jax.jit(functools.partial(sada_forward, n_segment=n_segment))
    out = jax.block_until_ready(fwd(x, params))

    ref = sada_reference(x, params, n_segment)
    assert out.shape == (N, C, D, W, H)
    assert bool(jnp.all(jnp.isfinite(out)))
    max_err = float(jnp.max(jnp.abs(out - ref)))
    # bf16 attention operands/probabilities + approx reciprocal => slightly
    # relaxed tolerance vs the pure-f32 reference.
    assert max_err < 2e-2, f"mismatch vs reference: {max_err}"
    print("KERNEL_OK")
</pallas_src>

<mosaic_0001>
module attributes {stable_mosaic.version = 11 : i64} {
  func.func @_sada_ssa_kernel(%arg0: i32, %arg1: memref<1x4x4x16xf32, #tpu.memory_space<vmem>>, %arg2: memref<3x4x4xf32, #tpu.memory_space<vmem>>, %arg3: memref<3x4x1xf32, #tpu.memory_space<vmem>>, %arg4: memref<2x3x4x4xf32, #tpu.memory_space<vmem>>, %arg5: memref<2x4x1xf32, #tpu.memory_space<vmem>>, %arg6: memref<1x4x4x16xf32, #tpu.memory_space<vmem>>) attributes {dimension_semantics = [#tpu.dimension_semantics<parallel>], iteration_bounds = array<i64: 2>, scalar_prefetch = 0 : i64, scratch_operands = 0 : i64, tpu.core_type = #tpu.core_type<tc>, window_params = [{transform_indices = @transform_0, window_bounds = array<i64: 1, 4, 4, 16>}, {pipeline_mode = #tpu.pipeline_mode<synchronous>, transform_indices = @transform_1, window_bounds = array<i64: 3, 4, 4>}, {pipeline_mode = #tpu.pipeline_mode<synchronous>, transform_indices = @transform_2, window_bounds = array<i64: 3, 4, 1>}, {pipeline_mode = #tpu.pipeline_mode<synchronous>, transform_indices = @transform_3, window_bounds = array<i64: 2, 3, 4, 4>}, {pipeline_mode = #tpu.pipeline_mode<synchronous>, transform_indices = @transform_4, window_bounds = array<i64: 2, 4, 1>}, {transform_indices = @transform_5, window_bounds = array<i64: 1, 4, 4, 16>}]} {
    %c0 = arith.constant 0 : index
    %c0_0 = arith.constant 0 : index
    %c0_1 = arith.constant 0 : index
    %c0_2 = arith.constant 0 : index
    %0 = vector.load %arg1[%c0, %c0_0, %c0_1, %c0_2] : memref<1x4x4x16xf32, #tpu.memory_space<vmem>>, vector<1x4x4x16xf32>
    %1 = vector.shape_cast %0 : vector<1x4x4x16xf32> to vector<4x4x16xf32>
    %c0_3 = arith.constant 0 : index
    %c0_4 = arith.constant 0 : index
    %c0_5 = arith.constant 0 : index
    %2 = vector.load %arg2[%c0_3, %c0_4, %c0_5] : memref<3x4x4xf32, #tpu.memory_space<vmem>>, vector<3x4x4xf32>
    %c0_6 = arith.constant 0 : index
    %c0_7 = arith.constant 0 : index
    %c0_8 = arith.constant 0 : index
    %3 = vector.load %arg3[%c0_6, %c0_7, %c0_8] : memref<3x4x1xf32, #tpu.memory_space<vmem>>, vector<3x4x1xf32>
    %c0_9 = arith.constant 0 : index
    %c0_10 = arith.constant 0 : index
    %c0_11 = arith.constant 0 : index
    %c0_12 = arith.constant 0 : index
    %4 = vector.load %arg4[%c0_9, %c0_10, %c0_11, %c0_12] : memref<2x3x4x4xf32, #tpu.memory_space<vmem>>, vector<2x3x4x4xf32>
    %c0_13 = arith.constant 0 : index
    %c0_14 = arith.constant 0 : index
    %c0_15 = arith.constant 0 : index
    %5 = vector.load %arg5[%c0_13, %c0_14, %c0_15] : memref<2x4x1xf32, #tpu.memory_space<vmem>>, vector<2x4x1xf32>
    %6 = vector.extract_strided_slice %2 {offsets = [0, 0, 0], sizes = [1, 4, 4], strides = [1, 1, 1]} : vector<3x4x4xf32> to vector<1x4x4xf32>
    %7 = vector.shape_cast %6 : vector<1x4x4xf32> to vector<4x4xf32>
    %8 = vector.extract_strided_slice %3 {offsets = [0, 0, 0], sizes = [1, 4, 1], strides = [1, 1, 1]} : vector<3x4x1xf32> to vector<1x4x1xf32>
    %9 = vector.shape_cast %8 : vector<1x4x1xf32> to vector<4x1xf32>
    %10 = vector.shape_cast %7 : vector<4x4xf32> to vector<1x4x4xf32>
    %11 = vector.broadcast %10 : vector<1x4x4xf32> to vector<4x4x4xf32>
    %cst = arith.constant dense<0.000000e+00> : vector<4x4x16xf32>
    %12 = tpu.matmul %11, %1, %cst {dimension_numbers = #tpu.dot_dimension_numbers<[2], [1], [1], [2], [0, 0, 0, 1, 1, 2], [0], [0]>} : vector<4x4x4xf32>, vector<4x4x16xf32>, vector<4x4x16xf32> -> vector<4x4x16xf32>
    %13 = vector.shape_cast %9 : vector<4x1xf32> to vector<1x4x1xf32>
    %14 = vector.broadcast %13 : vector<1x4x1xf32> to vector<4x4x16xf32>
    %15 = arith.addf %12, %14 : vector<4x4x16xf32>
    %cst_16 = arith.constant 5.000000e-01 : f32
    %16 = vector.broadcast %cst_16 : f32 to vector<4x4x16xf32>
    %17 = arith.mulf %15, %16 : vector<4x4x16xf32>
    %18 = vector.extract_strided_slice %2 {offsets = [1, 0, 0], sizes = [1, 4, 4], strides = [1, 1, 1]} : vector<3x4x4xf32> to vector<1x4x4xf32>
    %19 = vector.shape_cast %18 : vector<1x4x4xf32> to vector<4x4xf32>
    %20 = vector.extract_strided_slice %3 {offsets = [1, 0, 0], sizes = [1, 4, 1], strides = [1, 1, 1]} : vector<3x4x1xf32> to vector<1x4x1xf32>
    %21 = vector.shape_cast %20 : vector<1x4x1xf32> to vector<4x1xf32>
    %22 = vector.shape_cast %19 : vector<4x4xf32> to vector<1x4x4xf32>
    %23 = vector.broadcast %22 : vector<1x4x4xf32> to vector<4x4x4xf32>
    %cst_17 = arith.constant dense<0.000000e+00> : vector<4x4x16xf32>
    %24 = tpu.matmul %23, %1, %cst_17 {dimension_numbers = #tpu.dot_dimension_numbers<[2], [1], [1], [2], [0, 0, 0, 1, 1, 2], [0], [0]>} : vector<4x4x4xf32>, vector<4x4x16xf32>, vector<4x4x16xf32> -> vector<4x4x16xf32>
    %25 = vector.shape_cast %21 : vector<4x1xf32> to vector<1x4x1xf32>
    %26 = vector.broadcast %25 : vector<1x4x1xf32> to vector<4x4x16xf32>
    %27 = arith.addf %24, %26 : vector<4x4x16xf32>
    %28 = vector.extract_strided_slice %2 {offsets = [2, 0, 0], sizes = [1, 4, 4], strides = [1, 1, 1]} : vector<3x4x4xf32> to vector<1x4x4xf32>
    %29 = vector.shape_cast %28 : vector<1x4x4xf32> to vector<4x4xf32>
    %30 = vector.extract_strided_slice %3 {offsets = [2, 0, 0], sizes = [1, 4, 1], strides = [1, 1, 1]} : vector<3x4x1xf32> to vector<1x4x1xf32>
    %31 = vector.shape_cast %30 : vector<1x4x1xf32> to vector<4x1xf32>
    %32 = vector.shape_cast %29 : vector<4x4xf32> to vector<1x4x4xf32>
    %33 = vector.broadcast %32 : vector<1x4x4xf32> to vector<4x4x4xf32>
    %cst_18 = arith.constant dense<0.000000e+00> : vector<4x4x16xf32>
    %34 = tpu.matmul %33, %1, %cst_18 {dimension_numbers = #tpu.dot_dimension_numbers<[2], [1], [1], [2], [0, 0, 0, 1, 1, 2], [0], [0]>} : vector<4x4x4xf32>, vector<4x4x16xf32>, vector<4x4x16xf32> -> vector<4x4x16xf32>
    %35 = vector.shape_cast %31 : vector<4x1xf32> to vector<1x4x1xf32>
    %36 = vector.broadcast %35 : vector<1x4x1xf32> to vector<4x4x16xf32>
    %37 = arith.addf %34, %36 : vector<4x4x16xf32>
    %38 = arith.truncf %17 : vector<4x4x16xf32> to vector<4x4x16xbf16>
    %39 = arith.truncf %27 : vector<4x4x16xf32> to vector<4x4x16xbf16>
    %40 = arith.truncf %37 : vector<4x4x16xf32> to vector<4x4x16xbf16>
    %cst_19 = arith.constant dense<0.000000e+00> : vector<4x16x16xf32>
    %41 = tpu.matmul %38, %39, %cst_19 {dimension_numbers = #tpu.dot_dimension_numbers<[1], [1], [2], [2], [0, 0, 0, 2, 1, 2], [0], [0]>} : vector<4x4x16xbf16>, vector<4x4x16xbf16>, vector<4x16x16xf32> -> vector<4x16x16xf32>
    %cst_20 = arith.constant dense<0xFF800000> : vector<4x16xf32>
    %42 = vector.multi_reduction <maximumf>, %41, %cst_20 [2] : vector<4x16x16xf32> to vector<4x16xf32>
    %43 = vector.shape_cast %42 : vector<4x16xf32> to vector<4x16x1xf32>
    %44 = vector.broadcast %43 : vector<4x16x1xf32> to vector<4x16x16xf32>
    %45 = arith.subf %41, %44 : vector<4x16x16xf32>
    %46 = math.exp %45 : vector<4x16x16xf32>
    %cst_21 = arith.constant dense<0.000000e+00> : vector<4x16xf32>
    %47 = vector.multi_reduction <add>, %46, %cst_21 [2] : vector<4x16x16xf32> to vector<4x16xf32>
    %48 = vector.shape_cast %47 : vector<4x16xf32> to vector<4x16x1xf32>
    %49 = tpu.reciprocal %48 {approx = true} : vector<4x16x1xf32> -> vector<4x16x1xf32>
    %50 = vector.broadcast %49 : vector<4x16x1xf32> to vector<4x16x16xf32>
    %51 = arith.mulf %46, %50 : vector<4x16x16xf32>
    %52 = arith.truncf %51 : vector<4x16x16xf32> to vector<4x16x16xbf16>
    %cst_22 = arith.constant dense<0.000000e+00> : vector<4x4x16xf32>
    %53 = tpu.matmul %40, %52, %cst_22 {dimension_numbers = #tpu.dot_dimension_numbers<[2], [2], [1], [1], [0, 0, 0, 1, 1, 1], [0], [0]>} : vector<4x4x16xbf16>, vector<4x16x16xbf16>, vector<4x4x16xf32> -> vector<4x4x16xf32>
    %cst_23 = arith.constant dense<0.000000e+00> : vector<4x4x4xf32>
    %54 = tpu.matmul %38, %39, %cst_23 {dimension_numbers = #tpu.dot_dimension_numbers<[2], [2], [1], [1], [0, 0, 0, 1, 1, 1], [0], [0]>} : vector<4x4x16xbf16>, vector<4x4x16xbf16>, vector<4x4x4xf32> -> vector<4x4x4xf32>
    %cst_24 = arith.constant dense<0xFF800000> : vector<4x4xf32>
    %55 = vector.multi_reduction <maximumf>, %54, %cst_24 [2] : vector<4x4x4xf32> to vector<4x4xf32>
    %56 = vector.shape_cast %55 : vector<4x4xf32> to vector<4x4x1xf32>
    %57 = vector.broadcast %56 : vector<4x4x1xf32> to vector<4x4x4xf32>
    %58 = arith.subf %54, %57 : vector<4x4x4xf32>
    %59 = math.exp %58 : vector<4x4x4xf32>
    %cst_25 = arith.constant dense<0.000000e+00> : vector<4x4xf32>
    %60 = vector.multi_reduction <add>, %59, %cst_25 [2] : vector<4x4x4xf32> to vector<4x4xf32>
    %61 = vector.shape_cast %60 : vector<4x4xf32> to vector<4x4x1xf32>
    %62 = tpu.reciprocal %61 {approx = true} : vector<4x4x1xf32> -> vector<4x4x1xf32>
    %63 = vector.broadcast %62 : vector<4x4x1xf32> to vector<4x4x4xf32>
    %64 = arith.mulf %59, %63 : vector<4x4x4xf32>
    %65 = arith.truncf %64 : vector<4x4x4xf32> to vector<4x4x4xbf16>
    %cst_26 = arith.constant dense<0.000000e+00> : vector<4x4x16xf32>
    %66 = tpu.matmul %65, %40, %cst_26 {dimension_numbers = #tpu.dot_dimension_numbers<[2], [1], [1], [2], [0, 0, 0, 1, 1, 2], [0], [0]>} : vector<4x4x4xbf16>, vector<4x4x16xbf16>, vector<4x4x16xf32> -> vector<4x4x16xf32>
    %67 = arith.addf %53, %66 : vector<4x4x16xf32>
    %68 = vector.shape_cast %67 : vector<4x4x16xf32> to vector<1x4x4x16xf32>
    %cst_27 = arith.constant 0.000000e+00 : f32
    %69 = vector.broadcast %cst_27 : f32 to vector<1x1x4x16xf32>
    %70 = vector.extract_strided_slice %68 {offsets = [0, 0, 0, 0], sizes = [1, 3, 4, 16], strides = [1, 1, 1, 1]} : vector<1x4x4x16xf32> to vector<1x3x4x16xf32>
    %71 = tpu.concatenate %69, %70 in 1 : vector<1x1x4x16xf32>, vector<1x3x4x16xf32> -> vector<1x4x4x16xf32>
    %72 = vector.shape_cast %71 : vector<1x4x4x16xf32> to vector<4x4x16xf32>
    %73 = vector.extract_strided_slice %68 {offsets = [0, 1, 0, 0], sizes = [1, 3, 4, 16], strides = [1, 1, 1, 1]} : vector<1x4x4x16xf32> to vector<1x3x4x16xf32>
    %74 = tpu.concatenate %73, %69 in 1 : vector<1x3x4x16xf32>, vector<1x1x4x16xf32> -> vector<1x4x4x16xf32>
    %75 = vector.shape_cast %74 : vector<1x4x4x16xf32> to vector<4x4x16xf32>
    %76 = vector.extract_strided_slice %4 {offsets = [0, 1, 0, 0], sizes = [1, 1, 4, 4], strides = [1, 1, 1, 1]} : vector<2x3x4x4xf32> to vector<1x1x4x4xf32>
    %77 = vector.shape_cast %76 : vector<1x1x4x4xf32> to vector<4x4xf32>
    %78 = vector.extract_strided_slice %5 {offsets = [0, 0, 0], sizes = [1, 4, 1], strides = [1, 1, 1]} : vector<2x4x1xf32> to vector<1x4x1xf32>
    %79 = vector.shape_cast %78 : vector<1x4x1xf32> to vector<4x1xf32>
    %80 = vector.shape_cast %77 : vector<4x4xf32> to vector<1x4x4xf32>
    %81 = vector.broadcast %80 : vector<1x4x4xf32> to vector<4x4x4xf32>
    %cst_28 = arith.constant dense<0.000000e+00> : vector<4x4x16xf32>
    %82 = tpu.matmul %81, %67, %cst_28 {dimension_numbers = #tpu.dot_dimension_numbers<[2], [1], [1], [2], [0, 0, 0, 1, 1, 2], [0], [0]>} : vector<4x4x4xf32>, vector<4x4x16xf32>, vector<4x4x16xf32> -> vector<4x4x16xf32>
    %83 = vector.shape_cast %79 : vector<4x1xf32> to vector<1x4x1xf32>
    %84 = vector.broadcast %83 : vector<1x4x1xf32> to vector<4x4x16xf32>
    %85 = arith.addf %82, %84 : vector<4x4x16xf32>
    %86 = vector.extract_strided_slice %4 {offsets = [0, 0, 0, 0], sizes = [1, 1, 4, 4], strides = [1, 1, 1, 1]} : vector<2x3x4x4xf32> to vector<1x1x4x4xf32>
    %87 = vector.shape_cast %86 : vector<1x1x4x4xf32> to vector<4x4xf32>
    %88 = vector.shape_cast %87 : vector<4x4xf32> to vector<1x4x4xf32>
    %89 = vector.broadcast %88 : vector<1x4x4xf32> to vector<4x4x4xf32>
    %cst_29 = arith.constant dense<0.000000e+00> : vector<4x4x16xf32>
    %90 = tpu.matmul %89, %72, %cst_29 {dimension_numbers = #tpu.dot_dimension_numbers<[2], [1], [1], [2], [0, 0, 0, 1, 1, 2], [0], [0]>} : vector<4x4x4xf32>, vector<4x4x16xf32>, vector<4x4x16xf32> -> vector<4x4x16xf32>
    %91 = arith.addf %85, %90 : vector<4x4x16xf32>
    %92 = vector.extract_strided_slice %4 {offsets = [0, 2, 0, 0], sizes = [1, 1, 4, 4], strides = [1, 1, 1, 1]} : vector<2x3x4x4xf32> to vector<1x1x4x4xf32>
    %93 = vector.shape_cast %92 : vector<1x1x4x4xf32> to vector<4x4xf32>
    %94 = vector.shape_cast %93 : vector<4x4xf32> to vector<1x4x4xf32>
    %95 = vector.broadcast %94 : vector<1x4x4xf32> to vector<4x4x4xf32>
    %cst_30 = arith.constant dense<0.000000e+00> : vector<4x4x16xf32>
    %96 = tpu.matmul %95, %75, %cst_30 {dimension_numbers = #tpu.dot_dimension_numbers<[2], [1], [1], [2], [0, 0, 0, 1, 1, 2], [0], [0]>} : vector<4x4x4xf32>, vector<4x4x16xf32>, vector<4x4x16xf32> -> vector<4x4x16xf32>
    %97 = arith.addf %91, %96 : vector<4x4x16xf32>
    %98 = vector.shape_cast %97 : vector<4x4x16xf32> to vector<1x4x4x16xf32>
    %99 = vector.extract_strided_slice %4 {offsets = [1, 1, 0, 0], sizes = [1, 1, 4, 4], strides = [1, 1, 1, 1]} : vector<2x3x4x4xf32> to vector<1x1x4x4xf32>
    %100 = vector.shape_cast %99 : vector<1x1x4x4xf32> to vector<4x4xf32>
    %101 = vector.extract_strided_slice %5 {offsets = [1, 0, 0], sizes = [1, 4, 1], strides = [1, 1, 1]} : vector<2x4x1xf32> to vector<1x4x1xf32>
    %102 = vector.shape_cast %101 : vector<1x4x1xf32> to vector<4x1xf32>
    %103 = vector.shape_cast %100 : vector<4x4xf32> to vector<1x4x4xf32>
    %104 = vector.broadcast %103 : vector<1x4x4xf32> to vector<4x4x4xf32>
    %cst_31 = arith.constant dense<0.000000e+00> : vector<4x4x16xf32>
    %105 = tpu.matmul %104, %67, %cst_31 {dimension_numbers = #tpu.dot_dimension_numbers<[2], [1], [1], [2], [0, 0, 0, 1, 1, 2], [0], [0]>} : vector<4x4x4xf32>, vector<4x4x16xf32>, vector<4x4x16xf32> -> vector<4x4x16xf32>
    %106 = vector.shape_cast %102 : vector<4x1xf32> to vector<1x4x1xf32>
    %107 = vector.broadcast %106 : vector<1x4x1xf32> to vector<4x4x16xf32>
    %108 = arith.addf %105, %107 : vector<4x4x16xf32>
    %109 = vector.extract_strided_slice %4 {offsets = [1, 0, 0, 0], sizes = [1, 1, 4, 4], strides = [1, 1, 1, 1]} : vector<2x3x4x4xf32> to vector<1x1x4x4xf32>
    %110 = vector.shape_cast %109 : vector<1x1x4x4xf32> to vector<4x4xf32>
    %111 = vector.shape_cast %110 : vector<4x4xf32> to vector<1x4x4xf32>
    %112 = vector.broadcast %111 : vector<1x4x4xf32> to vector<4x4x4xf32>
    %cst_32 = arith.constant dense<0.000000e+00> : vector<4x4x16xf32>
    %113 = tpu.matmul %112, %72, %cst_32 {dimension_numbers = #tpu.dot_dimension_numbers<[2], [1], [1], [2], [0, 0, 0, 1, 1, 2], [0], [0]>} : vector<4x4x4xf32>, vector<4x4x16xf32>, vector<4x4x16xf32> -> vector<4x4x16xf32>
    %114 = arith.addf %108, %113 : vector<4x4x16xf32>
    %115 = vector.extract_strided_slice %4 {offsets = [1, 2, 0, 0], sizes = [1, 1, 4, 4], strides = [1, 1, 1, 1]} : vector<2x3x4x4xf32> to vector<1x1x4x4xf32>
    %116 = vector.shape_cast %115 : vector<1x1x4x4xf32> to vector<4x4xf32>
    %117 = vector.shape_cast %116 : vector<4x4xf32> to vector<1x4x4xf32>
    %118 = vector.broadcast %117 : vector<1x4x4xf32> to vector<4x4x4xf32>
    %cst_33 = arith.constant dense<0.000000e+00> : vector<4x4x16xf32>
    %119 = tpu.matmul %118, %75, %cst_33 {dimension_numbers = #tpu.dot_dimension_numbers<[2], [1], [1], [2], [0, 0, 0, 1, 1, 2], [0], [0]>} : vector<4x4x4xf32>, vector<4x4x16xf32>, vector<4x4x16xf32> -> vector<4x4x16xf32>
    %120 = arith.addf %114, %119 : vector<4x4x16xf32>
    %121 = vector.shape_cast %120 : vector<4x4x16xf32> to vector<1x4x4x16xf32>
    %122 = vector.shape_cast %37 : vector<4x4x16xf32> to vector<1x4x4x16xf32>
    %123 = vector.extract_strided_slice %98 {offsets = [0, 0, 0, 0], sizes = [1, 1, 4, 16], strides = [1, 1, 1, 1]} : vector<1x4x4x16xf32> to vector<1x1x4x16xf32>
    %124 = vector.broadcast %123 : vector<1x1x4x16xf32> to vector<1x4x4x16xf32>
    %125 = arith.mulf %124, %121 : vector<1x4x4x16xf32>
    %cst_34 = arith.constant dense<0.000000e+00> : vector<1x4x4xf32>
    %126 = vector.multi_reduction <add>, %125, %cst_34 [3] : vector<1x4x4x16xf32> to vector<1x4x4xf32>
    %127 = vector.shape_cast %126 : vector<1x4x4xf32> to vector<1x4x4x1xf32>
    %cst_35 = arith.constant dense<0.000000e+00> : vector<1x4x1xf32>
    %128 = vector.multi_reduction <add>, %127, %cst_35 [2] : vector<1x4x4x1xf32> to vector<1x4x1xf32>
    %129 = vector.shape_cast %128 : vector<1x4x1xf32> to vector<1x4x1x1xf32>
    %cst_36 = arith.constant dense<0xFF800000> : vector<1x1x1xf32>
    %130 = vector.multi_reduction <maximumf>, %129, %cst_36 [1] : vector<1x4x1x1xf32> to vector<1x1x1xf32>
    %131 = vector.shape_cast %130 : vector<1x1x1xf32> to vector<1x1x1x1xf32>
    %132 = vector.broadcast %131 : vector<1x1x1x1xf32> to vector<1x4x1x1xf32>
    %133 = arith.subf %129, %132 : vector<1x4x1x1xf32>
    %134 = math.exp %133 : vector<1x4x1x1xf32>
    %cst_37 = arith.constant dense<0.000000e+00> : vector<1x1x1xf32>
    %135 = vector.multi_reduction <add>, %134, %cst_37 [1] : vector<1x4x1x1xf32> to vector<1x1x1xf32>
    %136 = vector.shape_cast %135 : vector<1x1x1xf32> to vector<1x1x1x1xf32>
    %137 = tpu.reciprocal %136 {approx = true} : vector<1x1x1x1xf32> -> vector<1x1x1x1xf32>
    %138 = vector.broadcast %137 : vector<1x1x1x1xf32> to vector<1x4x1x1xf32>
    %139 = arith.mulf %134, %138 : vector<1x4x1x1xf32>
    %140 = vector.broadcast %139 : vector<1x4x1x1xf32> to vector<1x4x4x16xf32>
    %141 = arith.mulf %140, %122 : vector<1x4x4x16xf32>
    %cst_38 = arith.constant dense<0.000000e+00> : vector<1x4x16xf32>
    %142 = vector.multi_reduction <add>, %141, %cst_38 [1] : vector<1x4x4x16xf32> to vector<1x4x16xf32>
    %143 = vector.shape_cast %142 : vector<1x4x16xf32> to vector<1x1x4x16xf32>
    %c0_39 = arith.constant 0 : index
    %c0_40 = arith.constant 0 : index
    %c0_41 = arith.constant 0 : index
    %c0_42 = arith.constant 0 : index
    %144 = vector.load %arg6[%c0_39, %c0_40, %c0_41, %c0_42] : memref<1x4x4x16xf32, #tpu.memory_space<vmem>>, vector<1x1x4x16xf32>
    tpu.vector_store %arg6[%c0_39, %c0_40, %c0_41, %c0_42], %143 {strides = array<i32>} : memref<1x4x4x16xf32, #tpu.memory_space<vmem>>, vector<1x1x4x16xf32>,
    %145 = vector.extract_strided_slice %98 {offsets = [0, 1, 0, 0], sizes = [1, 1, 4, 16], strides = [1, 1, 1, 1]} : vector<1x4x4x16xf32> to vector<1x1x4x16xf32>
    %146 = vector.broadcast %145 : vector<1x1x4x16xf32> to vector<1x4x4x16xf32>
    %147 = arith.mulf %146, %121 : vector<1x4x4x16xf32>
    %cst_43 = arith.constant dense<0.000000e+00> : vector<1x4x4xf32>
    %148 = vector.multi_reduction <add>, %147, %cst_43 [3] : vector<1x4x4x16xf32> to vector<1x4x4xf32>
    %149 = vector.shape_cast %148 : vector<1x4x4xf32> to vector<1x4x4x1xf32>
    %cst_44 = arith.constant dense<0.000000e+00> : vector<1x4x1xf32>
    %150 = vector.multi_reduction <add>, %149, %cst_44 [2] : vector<1x4x4x1xf32> to vector<1x4x1xf32>
    %151 = vector.shape_cast %150 : vector<1x4x1xf32> to vector<1x4x1x1xf32>
    %cst_45 = arith.constant dense<0xFF800000> : vector<1x1x1xf32>
    %152 = vector.multi_reduction <maximumf>, %151, %cst_45 [1] : vector<1x4x1x1xf32> to vector<1x1x1xf32>
    %153 = vector.shape_cast %152 : vector<1x1x1xf32> to vector<1x1x1x1xf32>
    %154 = vector.broadcast %153 : vector<1x1x1x1xf32> to vector<1x4x1x1xf32>
    %155 = arith.subf %151, %154 : vector<1x4x1x1xf32>
    %156 = math.exp %155 : vector<1x4x1x1xf32>
    %cst_46 = arith.constant dense<0.000000e+00> : vector<1x1x1xf32>
    %157 = vector.multi_reduction <add>, %156, %cst_46 [1] : vector<1x4x1x1xf32> to vector<1x1x1xf32>
    %158 = vector.shape_cast %157 : vector<1x1x1xf32> to vector<1x1x1x1xf32>
    %159 = tpu.reciprocal %158 {approx = true} : vector<1x1x1x1xf32> -> vector<1x1x1x1xf32>
    %160 = vector.broadcast %159 : vector<1x1x1x1xf32> to vector<1x4x1x1xf32>
    %161 = arith.mulf %156, %160 : vector<1x4x1x1xf32>
    %162 = vector.broadcast %161 : vector<1x4x1x1xf32> to vector<1x4x4x16xf32>
    %163 = arith.mulf %162, %122 : vector<1x4x4x16xf32>
    %cst_47 = arith.constant dense<0.000000e+00> : vector<1x4x16xf32>
    %164 = vector.multi_reduction <add>, %163, %cst_47 [1] : vector<1x4x4x16xf32> to vector<1x4x16xf32>
    %165 = vector.shape_cast %164 : vector<1x4x16xf32> to vector<1x1x4x16xf32>
    %c0_48 = arith.constant 0 : index
    %c1 = arith.constant 1 : index
    %c0_49 = arith.constant 0 : index
    %c0_50 = arith.constant 0 : index
    %166 = vector.load %arg6[%c0_48, %c1, %c0_49, %c0_50] : memref<1x4x4x16xf32, #tpu.memory_space<vmem>>, vector<1x1x4x16xf32>
    tpu.vector_store %arg6[%c0_48, %c1, %c0_49, %c0_50], %165 {strides = array<i32>} : memref<1x4x4x16xf32, #tpu.memory_space<vmem>>, vector<1x1x4x16xf32>,
    %167 = vector.extract_strided_slice %98 {offsets = [0, 2, 0, 0], sizes = [1, 1, 4, 16], strides = [1, 1, 1, 1]} : vector<1x4x4x16xf32> to vector<1x1x4x16xf32>
    %168 = vector.broadcast %167 : vector<1x1x4x16xf32> to vector<1x4x4x16xf32>
    %169 = arith.mulf %168, %121 : vector<1x4x4x16xf32>
    %cst_51 = arith.constant dense<0.000000e+00> : vector<1x4x4xf32>
    %170 = vector.multi_reduction <add>, %169, %cst_51 [3] : vector<1x4x4x16xf32> to vector<1x4x4xf32>
    %171 = vector.shape_cast %170 : vector<1x4x4xf32> to vector<1x4x4x1xf32>
    %cst_52 = arith.constant dense<0.000000e+00> : vector<1x4x1xf32>
    %172 = vector.multi_reduction <add>, %171, %cst_52 [2] : vector<1x4x4x1xf32> to vector<1x4x1xf32>
    %173 = vector.shape_cast %172 : vector<1x4x1xf32> to vector<1x4x1x1xf32>
    %cst_53 = arith.constant dense<0xFF800000> : vector<1x1x1xf32>
    %174 = vector.multi_reduction <maximumf>, %173, %cst_53 [1] : vector<1x4x1x1xf32> to vector<1x1x1xf32>
    %175 = vector.shape_cast %174 : vector<1x1x1xf32> to vector<1x1x1x1xf32>
    %176 = vector.broadcast %175 : vector<1x1x1x1xf32> to vector<1x4x1x1xf32>
    %177 = arith.subf %173, %176 : vector<1x4x1x1xf32>
    %178 = math.exp %177 : vector<1x4x1x1xf32>
    %cst_54 = arith.constant dense<0.000000e+00> : vector<1x1x1xf32>
    %179 = vector.multi_reduction <add>, %178, %cst_54 [1] : vector<1x4x1x1xf32> to vector<1x1x1xf32>
    %180 = vector.shape_cast %179 : vector<1x1x1xf32> to vector<1x1x1x1xf32>
    %181 = tpu.reciprocal %180 {approx = true} : vector<1x1x1x1xf32> -> vector<1x1x1x1xf32>
    %182 = vector.broadcast %181 : vector<1x1x1x1xf32> to vector<1x4x1x1xf32>
    %183 = arith.mulf %178, %182 : vector<1x4x1x1xf32>
    %184 = vector.broadcast %183 : vector<1x4x1x1xf32> to vector<1x4x4x16xf32>
    %185 = arith.mulf %184, %122 : vector<1x4x4x16xf32>
    %cst_55 = arith.constant dense<0.000000e+00> : vector<1x4x16xf32>
    %186 = vector.multi_reduction <add>, %185, %cst_55 [1] : vector<1x4x4x16xf32> to vector<1x4x16xf32>
    %187 = vector.shape_cast %186 : vector<1x4x16xf32> to vector<1x1x4x16xf32>
    %c0_56 = arith.constant 0 : index
    %c2 = arith.constant 2 : index
    %c0_57 = arith.constant 0 : index
    %c0_58 = arith.constant 0 : index
    %188 = vector.load %arg6[%c0_56, %c2, %c0_57, %c0_58] : memref<1x4x4x16xf32, #tpu.memory_space<vmem>>, vector<1x1x4x16xf32>
    tpu.vector_store %arg6[%c0_56, %c2, %c0_57, %c0_58], %187 {strides = array<i32>} : memref<1x4x4x16xf32, #tpu.memory_space<vmem>>, vector<1x1x4x16xf32>,
    %189 = vector.extract_strided_slice %98 {offsets = [0, 3, 0, 0], sizes = [1, 1, 4, 16], strides = [1, 1, 1, 1]} : vector<1x4x4x16xf32> to vector<1x1x4x16xf32>
    %190 = vector.broadcast %189 : vector<1x1x4x16xf32> to vector<1x4x4x16xf32>
    %191 = arith.mulf %190, %121 : vector<1x4x4x16xf32>
    %cst_59 = arith.constant dense<0.000000e+00> : vector<1x4x4xf32>
    %192 = vector.multi_reduction <add>, %191, %cst_59 [3] : vector<1x4x4x16xf32> to vector<1x4x4xf32>
    %193 = vector.shape_cast %192 : vector<1x4x4xf32> to vector<1x4x4x1xf32>
    %cst_60 = arith.constant dense<0.000000e+00> : vector<1x4x1xf32>
    %194 = vector.multi_reduction <add>, %193, %cst_60 [2] : vector<1x4x4x1xf32> to vector<1x4x1xf32>
    %195 = vector.shape_cast %194 : vector<1x4x1xf32> to vector<1x4x1x1xf32>
    %cst_61 = arith.constant dense<0xFF800000> : vector<1x1x1xf32>
    %196 = vector.multi_reduction <maximumf>, %195, %cst_61 [1] : vector<1x4x1x1xf32> to vector<1x1x1xf32>
    %197 = vector.shape_cast %196 : vector<1x1x1xf32> to vector<1x1x1x1xf32>
    %198 = vector.broadcast %197 : vector<1x1x1x1xf32> to vector<1x4x1x1xf32>
    %199 = arith.subf %195, %198 : vector<1x4x1x1xf32>
    %200 = math.exp %199 : vector<1x4x1x1xf32>
    %cst_62 = arith.constant dense<0.000000e+00> : vector<1x1x1xf32>
    %201 = vector.multi_reduction <add>, %200, %cst_62 [1] : vector<1x4x1x1xf32> to vector<1x1x1xf32>
    %202 = vector.shape_cast %201 : vector<1x1x1xf32> to vector<1x1x1x1xf32>
    %203 = tpu.reciprocal %202 {approx = true} : vector<1x1x1x1xf32> -> vector<1x1x1x1xf32>
    %204 = vector.broadcast %203 : vector<1x1x1x1xf32> to vector<1x4x1x1xf32>
    %205 = arith.mulf %200, %204 : vector<1x4x1x1xf32>
    %206 = vector.broadcast %205 : vector<1x4x1x1xf32> to vector<1x4x4x16xf32>
    %207 = arith.mulf %206, %122 : vector<1x4x4x16xf32>
    %cst_63 = arith.constant dense<0.000000e+00> : vector<1x4x16xf32>
    %208 = vector.multi_reduction <add>, %207, %cst_63 [1] : vector<1x4x4x16xf32> to vector<1x4x16xf32>
    %209 = vector.shape_cast %208 : vector<1x4x16xf32> to vector<1x1x4x16xf32>
    %c0_64 = arith.constant 0 : index
    %c3 = arith.constant 3 : index
    %c0_65 = arith.constant 0 : index
    %c0_66 = arith.constant 0 : index
    %210 = vector.load %arg6[%c0_64, %c3, %c0_65, %c0_66] : memref<1x4x4x16xf32, #tpu.memory_space<vmem>>, vector<1x1x4x16xf32>
    tpu.vector_store %arg6[%c0_64, %c3, %c0_65, %c0_66], %209 {strides = array<i32>} : memref<1x4x4x16xf32, #tpu.memory_space<vmem>>, vector<1x1x4x16xf32>,
    return
  }
  func.func @transform_0(%arg0: i32) -> (i32, i32, i32, i32) {
    %c0_i32 = arith.constant 0 : i32
    %c0_i32_0 = arith.constant 0 : i32
    %c0_i32_1 = arith.constant 0 : i32
    %c0_i32_2 = arith.constant 0 : i32
    return %arg0, %c0_i32, %c0_i32_0, %c0_i32_1 : i32, i32, i32, i32
  }
  func.func @transform_1(%arg0: i32) -> (i32, i32, i32) {
    %c0_i32 = arith.constant 0 : i32
    %c0_i32_0 = arith.constant 0 : i32
    %c0_i32_1 = arith.constant 0 : i32
    %c0_i32_2 = arith.constant 0 : i32
    return %c0_i32, %c0_i32_0, %c0_i32_1 : i32, i32, i32
  }
  func.func @transform_2(%arg0: i32) -> (i32, i32, i32) {
    %c0_i32 = arith.constant 0 : i32
    %c0_i32_0 = arith.constant 0 : i32
    %c0_i32_1 = arith.constant 0 : i32
    %c0_i32_2 = arith.constant 0 : i32
    return %c0_i32, %c0_i32_0, %c0_i32_1 : i32, i32, i32
  }
  func.func @transform_3(%arg0: i32) -> (i32, i32, i32, i32) {
    %c0_i32 = arith.constant 0 : i32
    %c0_i32_0 = arith.constant 0 : i32
    %c0_i32_1 = arith.constant 0 : i32
    %c0_i32_2 = arith.constant 0 : i32
    %c0_i32_3 = arith.constant 0 : i32
    return %c0_i32, %c0_i32_0, %c0_i32_1, %c0_i32_2 : i32, i32, i32, i32
  }
  func.func @transform_4(%arg0: i32) -> (i32, i32, i32) {
    %c0_i32 = arith.constant 0 : i32
    %c0_i32_0 = arith.constant 0 : i32
    %c0_i32_1 = arith.constant 0 : i32
    %c0_i32_2 = arith.constant 0 : i32
    return %c0_i32, %c0_i32_0, %c0_i32_1 : i32, i32, i32
  }
  func.func @transform_5(%arg0: i32) -> (i32, i32, i32, i32) {
    %c0_i32 = arith.constant 0 : i32
    %c0_i32_0 = arith.constant 0 : i32
    %c0_i32_1 = arith.constant 0 : i32
    %c0_i32_2 = arith.constant 0 : i32
    return %arg0, %c0_i32, %c0_i32_0, %c0_i32_1 : i32, i32, i32, i32
  }
}

</mosaic_0001>

<llo_original>
// kernel: sada_forward.3
$region0: #{sada_forward.3}
  #allocation0 [shape = 'u32[]', space=smem, size = 0x4, offset = 0x4, fixed_abs, tag = 'smem constant byte address 0x4 - core index']
  #allocation1 [shape = 'u32[72,128]{1,0:T(1,128)}', space=vmem, size = 0x9000, scoped, tag = 'internal scratch']
  %s0 = inlined_call_operand.vmem [shape: f32[2,4,4,16], index: 0, kind: input, shape index: {}]
  %s1 = inlined_call_operand.vmem [shape: f32[3,4,4], index: 1, kind: input, shape index: {}]
  %s2 = inlined_call_operand.vmem [shape: f32[3,4,1], index: 2, kind: input, shape index: {}]
  %s3 = inlined_call_operand.vmem [shape: f32[2,3,4,4], index: 3, kind: input, shape index: {}]
  %s4 = inlined_call_operand.vmem [shape: f32[2,4,1], index: 4, kind: input, shape index: {}]
  %s5 = inlined_call_operand.vmem [shape: f32[2,4,4,16], index: 5, kind: output, shape index: {}]
  %s6 = sld [smem:[#allocation0]]
  $region53: #{sada_forward.3} parent=0
    _
  %s8 = ssub.s32 1, %s6
  %s9 = scalar_select 0, %s8, %s6
  loop: start=0, step=1, limit=4
  $region2: #{sada_forward.3} parent=0 // loop_pre_header
    _
  $region3: #{sada_forward.3} parent=0 // loop_header
    %s11 = sphi 0, %s15
    %p12 = scmp.ge.s32.totalorder %s11, 4
    %s21 = sphi 0, %s23
    %s24 = sphi 0, %s21
    %s25 = sphi 0, %s24
    %s41 = sphi 0, %s25
    %s45 = sphi 0, %s45
    %s47 = sphi 0, %s45
    %s48 = sphi 0, %s47
    %s62 = sphi 0, %s48
    %s66 = sphi 0, %s66
    %s68 = sphi 0, %s66
    %s69 = sphi 0, %s68
    %s83 = sphi 0, %s69
    %s87 = sphi 0, %s87
    %s89 = sphi 0, %s87
    %s90 = sphi 0, %s89
    %s104 = sphi 0, %s90
    %s108 = sphi 0, %s108
    %s110 = sphi 0, %s108
    %s111 = sphi 0, %s110
    %s125 = sphi 0, %s111
    %s131 = sphi 0, %s133
    %s134 = sphi 0, %s131
    %s135 = sphi 0, %s134
    %s151 = sphi 0, %s135
  $region4: #{sada_forward.3} parent=0 // loop_header_branch
    %14 = sbr.rel (%p12) target = $region8
  $region5: #{sada_forward.3} parent=0 // loop_body
    %s16 = ssub.s32 %s11, 1
    %s17 = ssub.s32 %s11, 2
    %s18 = sadd.s32 %s11, 1
    %s19 = ssub.s32 %s11, %s18
    %p20 = scmp.eq.s32.totalorder %s19, 0
    %s22 = sadd.s32 %s21, 1
    %s23 = scalar_select %p20, %s21, %s22
    %p26 = pneg %p20
    %p27 = scmp.eq.s32.totalorder %s11, 1
    %p28 = por %p26, %p27
    %p29 = scmp.ne.s32.totalorder %s21, %s24
    %p30 = scmp.eq.s32.totalorder %s11, 0
    %p31 = por %p29, %p30
    %p32 = scmp.ne.s32.totalorder %s21, %s24
    %p33 = scmp.eq.s32.totalorder %s16, 1
    %p34 = por %p32, %p33
    %p35 = scmp.ne.s32.totalorder %s24, %s25
    %p36 = scmp.eq.s32.totalorder %s16, 0
    %p37 = por %p35, %p36
    %p38 = scmp.ne.s32.totalorder %s24, %s25
    %p39 = scmp.eq.s32.totalorder %s17, 1
    %p40 = por %p38, %p39
    %p42 = scmp.ne.s32.totalorder %s25, %s41
    %p43 = scmp.eq.s32.totalorder %s17, 0
    %p44 = por %p42, %p43
    %s46 = sadd.s32 %s45, 1
    %p49 = scmp.eq.s32.totalorder %s11, 1
    %p50 = scmp.ne.s32.totalorder %s45, %s47
    %p51 = scmp.eq.s32.totalorder %s11, 0
    %p52 = por %p50, %p51
    %p53 = scmp.ne.s32.totalorder %s45, %s47
    %p54 = scmp.eq.s32.totalorder %s16, 1
    %p55 = por %p53, %p54
    %p56 = scmp.ne.s32.totalorder %s47, %s48
    %p57 = scmp.eq.s32.totalorder %s16, 0
    %p58 = por %p56, %p57
    %p59 = scmp.ne.s32.totalorder %s47, %s48
    %p60 = scmp.eq.s32.totalorder %s17, 1
    %p61 = por %p59, %p60
    %p63 = scmp.ne.s32.totalorder %s48, %s62
    %p64 = scmp.eq.s32.totalorder %s17, 0
    %p65 = por %p63, %p64
    %s67 = sadd.s32 %s66, 1
    %p70 = scmp.eq.s32.totalorder %s11, 1
    %p71 = scmp.ne.s32.totalorder %s66, %s68
    %p72 = scmp.eq.s32.totalorder %s11, 0
    %p73 = por %p71, %p72
    %p74 = scmp.ne.s32.totalorder %s66, %s68
    %p75 = scmp.eq.s32.totalorder %s16, 1
    %p76 = por %p74, %p75
    %p77 = scmp.ne.s32.totalorder %s68, %s69
    %p78 = scmp.eq.s32.totalorder %s16, 0
    %p79 = por %p77, %p78
    %p80 = scmp.ne.s32.totalorder %s68, %s69
    %p81 = scmp.eq.s32.totalorder %s17, 1
    %p82 = por %p80, %p81
    %p84 = scmp.ne.s32.totalorder %s69, %s83
    %p85 = scmp.eq.s32.totalorder %s17, 0
    %p86 = por %p84, %p85
    %s88 = sadd.s32 %s87, 1
    %p91 = scmp.eq.s32.totalorder %s11, 1
    %p92 = scmp.ne.s32.totalorder %s87, %s89
    %p93 = scmp.eq.s32.totalorder %s11, 0
    %p94 = por %p92, %p93
    %p95 = scmp.ne.s32.totalorder %s87, %s89
    %p96 = scmp.eq.s32.totalorder %s16, 1
    %p97 = por %p95, %p96
    %p98 = scmp.ne.s32.totalorder %s89, %s90
    %p99 = scmp.eq.s32.totalorder %s16, 0
    %p100 = por %p98, %p99
    %p101 = scmp.ne.s32.totalorder %s89, %s90
    %p102 = scmp.eq.s32.totalorder %s17, 1
    %p103 = por %p101, %p102
    %p105 = scmp.ne.s32.totalorder %s90, %s104
    %p106 = scmp.eq.s32.totalorder %s17, 0
    %p107 = por %p105, %p106
    %s109 = sadd.s32 %s108, 1
    %p112 = scmp.eq.s32.totalorder %s11, 1
    %p113 = scmp.ne.s32.totalorder %s108, %s110
    %p114 = scmp.eq.s32.totalorder %s11, 0
    %p115 = por %p113, %p114
    %p116 = scmp.ne.s32.totalorder %s108, %s110
    %p117 = scmp.eq.s32.totalorder %s16, 1
    %p118 = por %p116, %p117
    %p119 = scmp.ne.s32.totalorder %s110, %s111
    %p120 = scmp.eq.s32.totalorder %s16, 0
    %p121 = por %p119, %p120
    %p122 = scmp.ne.s32.totalorder %s110, %s111
    %p123 = scmp.eq.s32.totalorder %s17, 1
    %p124 = por %p122, %p123
    %p126 = scmp.ne.s32.totalorder %s111, %s125
    %p127 = scmp.eq.s32.totalorder %s17, 0
    %p128 = por %p126, %p127
    %s129 = ssub.s32 %s11, %s18
    %p130 = scmp.eq.s32.totalorder %s129, 0
    %s132 = sadd.s32 %s131, 1
    %s133 = scalar_select %p130, %s131, %s132
    %p136 = pneg %p130
    %p137 = scmp.eq.s32.totalorder %s11, 1
    %p138 = por %p136, %p137
    %p139 = scmp.ne.s32.totalorder %s131, %s134
    %p140 = scmp.eq.s32.totalorder %s11, 0
    %p141 = por %p139, %p140
    %p142 = scmp.ne.s32.totalorder %s131, %s134
    %p143 = scmp.eq.s32.totalorder %s16, 1
    %p144 = por %p142, %p143
    %p145 = scmp.ne.s32.totalorder %s134, %s135
    %p146 = scmp.eq.s32.totalorder %s16, 0
    %p147 = por %p145, %p146
    %p148 = scmp.ne.s32.totalorder %s134, %s135
    %p149 = scmp.eq.s32.totalorder %s17, 1
    %p150 = por %p148, %p149
    %p152 = scmp.ne.s32.totalorder %s135, %s151
    %p153 = scmp.eq.s32.totalorder %s17, 0
    %p154 = por %p152, %p153
    %p155 = scmp.le.s32.totalorder 1, %s11
    %p156 = scmp.lt.s32.totalorder %s11, 3
    %p157 = pnand %p155, %p156
    %p158 = pneg %p157
    // Predicated region
    $region9: #{sada_forward.3} parent=5 // pred_check
      _
    $region10: #{sada_forward.3} parent=5 // pred_check_branch
      %160 = sbr.rel (%p157) target = $region12
    $region11: #{sada_forward.3} parent=5 // pred_region
      %s161 = ssub.s32 %s11, 1
      // Predicated region
      $region13: #{sada_forward.3} parent=11 // pred_check
        %p162 = pneg %p58
      $region14: #{sada_forward.3} parent=11 // pred_check_branch
        %164 = sbr.rel (%p162) target = $region16
      $region15: #{sada_forward.3} parent=11 // pred_region
        _
      $region16: #{sada_forward.3} parent=11 // pred_fallthru
        _
      // Predicated region
      $region17: #{sada_forward.3} parent=11 // pred_check
        %p165 = pneg %p79
      $region18: #{sada_forward.3} parent=11 // pred_check_branch
        %167 = sbr.rel (%p165) target = $region20
      $region19: #{sada_forward.3} parent=11 // pred_region
        _
      $region20: #{sada_forward.3} parent=11 // pred_fallthru
        _
      // Predicated region
      $region21: #{sada_forward.3} parent=11 // pred_check
        %p168 = pneg %p100
      $region22: #{sada_forward.3} parent=11 // pred_check_branch
        %170 = sbr.rel (%p168) target = $region24
      $region23: #{sada_forward.3} parent=11 // pred_region
        _
      $region24: #{sada_forward.3} parent=11 // pred_fallthru
        _
      // Predicated region
      $region25: #{sada_forward.3} parent=11 // pred_check
        %p171 = pneg %p121
      $region26: #{sada_forward.3} parent=11 // pred_check_branch
        %173 = sbr.rel (%p171) target = $region28
      $region27: #{sada_forward.3} parent=11 // pred_region
        _
      $region28: #{sada_forward.3} parent=11 // pred_fallthru
        _
    $region12: #{sada_forward.3} parent=5 // pred_fallthru
      _
    %p174 = scmp.lt.s32.totalorder %s11, 2
    // Predicated region
    $region29: #{sada_forward.3} parent=5 // pred_check
      %p175 = pneg %p174
    $region30: #{sada_forward.3} parent=5 // pred_check_branch
      %177 = sbr.rel (%p175) target = $region32
    $region31: #{sada_forward.3} parent=5 // pred_region
      // Predicated region
      $region33: #{sada_forward.3} parent=31 // pred_check
        %p178 = pneg %p31
      $region34: #{sada_forward.3} parent=31 // pred_check_branch
        %180 = sbr.rel (%p178) target = $region36
      $region35: #{sada_forward.3} parent=31 // pred_region
        %p181 = scmp.lt.s32.totalorder %s11, 1
        %s182 = scalar_select %p181, %s11, 1
        %s183 = smul.addr %s182, 4
        %s184 = smul.addr %s183, 4
        %s185 = scalar_lea.vmem %s0, %s184
      $region36: #{sada_forward.3} parent=31 // pred_fallthru
        _
    $region32: #{sada_forward.3} parent=5 // pred_fallthru
      _
    %p186 = scmp.le.s32.totalorder 1, %s11
    %p187 = scmp.lt.s32.totalorder %s11, 3
    %p188 = pnand %p186, %p187
    %p189 = pneg %p188
    // Predicated region
    $region37: #{sada_forward.3} parent=5 // pred_check
      _
    $region38: #{sada_forward.3} parent=5 // pred_check_branch
      %191 = sbr.rel (%p188) target = $region40
    $region39: #{sada_forward.3} parent=5 // pred_region
      %s192 = ssub.s32 %s11, 1
      %p193 = scmp.lt.s32.totalorder %s16, 1
      %s194 = scalar_select %p193, %s16, 1
      %s195 = smul.addr %s194, 4
      %s196 = smul.addr %s195, 4
      %s197 = scalar_lea.vmem %s0, %s196
      %p198 = pneg %p37
      %p199 = pneg %p34
      %p200 = pneg %p58
      %p201 = pneg %p55
      %p202 = pneg %p79
      %p203 = pneg %p76
      %p204 = pneg %p100
      %p205 = pneg %p97
      %p206 = pneg %p121
      %p207 = pneg %p118
      %p208 = pneg %p147
      %p209 = pneg %p144
      %p210 = scmp.lt.s32.totalorder %s16, 1
      %s211 = scalar_select %p210, %s16, 1
      %s212 = smul.addr %s211, 4
      %s213 = smul.addr %s212, 4
      %s214 = scalar_lea.vmem %s5, %s213
      %p215 = scmp.lt.s32.totalorder %s16, 1
      %s216 = scalar_select %p215, %s16, 1
      %s217 = smul.addr %s216, 4
      %s218 = smul.addr %s217, 4
      %s219 = scalar_lea.vmem %s0, %s218
      %p220 = scmp.lt.s32.totalorder %s16, 1
      %s221 = scalar_select %p220, %s16, 1
      %s222 = smul.addr %s221, 4
      %s223 = smul.addr %s222, 4
      %s224 = scalar_lea.vmem %s5, %s223
      %v226 = vld [vmem:[%s219] sm:$0xf]
      %v227 = vld [vmem:[%s219 + $0x4] sm:$0xf]
      %v228 = vld [vmem:[%s219 + $0x8] sm:$0xf]
      %v229 = vld [vmem:[%s219 + $0xc] sm:$0xf]
      %v230 = vld [vmem:[%s1] sm:$0xf]
      %v231 = vld [vmem:[%s1 + $0x4] sm:$0xf]
      %v232 = vld [vmem:[%s1 + $0x8] sm:$0xf]
      %v233 = vld [vmem:[%s2] sm:$0xf]
      %v234 = vld [vmem:[%s2 + $0x4] sm:$0xf]
      %v235 = vld [vmem:[%s2 + $0x8] sm:$0xf]
      %v236 = vld [vmem:[%s3] sm:$0xf]
      %v237 = vld [vmem:[%s3 + $0x4] sm:$0xf]
      %v238 = vld [vmem:[%s3 + $0x8] sm:$0xf]
      %v239 = vld [vmem:[%s3 + $0xc] sm:$0xf]
      %v240 = vld [vmem:[%s3 + $0x10] sm:$0xf]
      %v241 = vld [vmem:[%s3 + $0x14] sm:$0xf]
      %v242 = vld [vmem:[%s4] sm:$0xf]
      %v243 = vld [vmem:[%s4 + $0x4] sm:$0xf]
      %245 = vset.pattern.permute.xlu0 0
      %246 = vperm.xlu0 %245, %v233
      %v247 = vpop.permute.xlu0 %246
      %vm249 = vcmask 31744
      %v251 = vsel %vm249, %v230, 0
      %vm253 = vcmask 1043456
      %v255 = vsel %vm253, %v226, 0
      %257 = vmatpush.msra.mxu0 0.0
      %258 = vmatpush.msra.mxu0 0.0
      %259 = vmatpush.msra.mxu0 0.0
      %260 = vmatpush.msra.mxu0 0.0
      %261 = vmatpush.msra.mxu0 0.0
      %262 = vmatpush.msra.mxu0 0.0
      %263 = vmatpush.msra.mxu0 0.0
      %264 = vmatpush.msra.mxu0 0.0
      %265 = vmatpush.msra.mxu0 0.0
      %266 = vmatpush.msra.mxu0 0.0
      %267 = vmatpush.msra.mxu0 0.0
      %268 = vmatpush.msra.mxu0 0.0
      %269 = vmatpush.msra.mxu0 0.0
      %270 = vmatpush.msra.mxu0 0.0
      %271 = vmatpush.msra.mxu0 0.0
      %272 = vmatpush.msra.mxu0 %v255
      %273 = vmatmul.f32.gmra.mxu0 %v251
      %v274 = vpop.f32.mrf.mxu0
      %v275 = vadd.f32 %v247, %v274
      %276 = vdwg.mxu0
      %v278 = vsel %vm253, %v227, 0
      %280 = vmatpush.msra.mxu0 0.0
      %281 = vmatpush.msra.mxu0 0.0
      %282 = vmatpush.msra.mxu0 0.0
      %283 = vmatpush.msra.mxu0 0.0
      %284 = vmatpush.msra.mxu0 0.0
      %285 = vmatpush.msra.mxu0 0.0
      %286 = vmatpush.msra.mxu0 0.0
      %287 = vmatpush.msra.mxu0 0.0
      %288 = vmatpush.msra.mxu0 0.0
      %289 = vmatpush.msra.mxu0 0.0
      %290 = vmatpush.msra.mxu0 0.0
      %291 = vmatpush.msra.mxu0 0.0
      %292 = vmatpush.msra.mxu0 0.0
      %293 = vmatpush.msra.mxu0 0.0
      %294 = vmatpush.msra.mxu0 0.0
      %295 = vmatpush.msra.mxu0 %v278
      %296 = vmatmul.f32.gmra.mxu0 %v251
      %v297 = vpop.f32.mrf.mxu0
      %v298 = vadd.f32 %v247, %v297
      %299 = vdwg.mxu0
      %v301 = vsel %vm253, %v228, 0
      %303 = vmatpush.msra.mxu0 0.0
      %304 = vmatpush.msra.mxu0 0.0
      %305 = vmatpush.msra.mxu0 0.0
      %306 = vmatpush.msra.mxu0 0.0
      %307 = vmatpush.msra.mxu0 0.0
      %308 = vmatpush.msra.mxu0 0.0
      %309 = vmatpush.msra.mxu0 0.0
      %310 = vmatpush.msra.mxu0 0.0
      %311 = vmatpush.msra.mxu0 0.0
      %312 = vmatpush.msra.mxu0 0.0
      %313 = vmatpush.msra.mxu0 0.0
      %314 = vmatpush.msra.mxu0 0.0
      %315 = vmatpush.msra.mxu0 0.0
      %316 = vmatpush.msra.mxu0 0.0
      %317 = vmatpush.msra.mxu0 0.0
      %318 = vmatpush.msra.mxu0 %v301
      %319 = vmatmul.f32.gmra.mxu0 %v251
      %v320 = vpop.f32.mrf.mxu0
      %v321 = vadd.f32 %v247, %v320
      %322 = vdwg.mxu0
      %v324 = vsel %vm253, %v229, 0
      %326 = vmatpush.msra.mxu0 0.0
      %327 = vmatpush.msra.mxu0 0.0
      %328 = vmatpush.msra.mxu0 0.0
      %329 = vmatpush.msra.mxu0 0.0
      %330 = vmatpush.msra.mxu0 0.0
      %331 = vmatpush.msra.mxu0 0.0
      %332 = vmatpush.msra.mxu0 0.0
      %333 = vmatpush.msra.mxu0 0.0
      %334 = vmatpush.msra.mxu0 0.0
      %335 = vmatpush.msra.mxu0 0.0
      %336 = vmatpush.msra.mxu0 0.0
      %337 = vmatpush.msra.mxu0 0.0
      %338 = vmatpush.msra.mxu0 0.0
      %339 = vmatpush.msra.mxu0 0.0
      %340 = vmatpush.msra.mxu0 0.0
      %341 = vmatpush.msra.mxu0 %v324
      %342 = vmatmul.f32.gmra.mxu0 %v251
      %v343 = vpop.f32.mrf.mxu0
      %v344 = vadd.f32 %v247, %v343
      %345 = vdwg.mxu0
      %v346 = vmul.f32 %v275, 0.5
      %v347 = vmul.f32 %v298, 0.5
      %v348 = vmul.f32 %v321, 0.5
      %v349 = vmul.f32 %v344, 0.5
      %351 = vset.pattern.permute.xlu0 0
      %352 = vperm.xlu0 %351, %v234
      %v353 = vpop.permute.xlu0 %352
      %v356 = vsel %vm249, %v231, 0
      %358 = vmatpush.msra.mxu0 0.0
      %359 = vmatpush.msra.mxu0 0.0
      %360 = vmatpush.msra.mxu0 0.0
      %361 = vmatpush.msra.mxu0 0.0
      %362 = vmatpush.msra.mxu0 0.0
      %363 = vmatpush.msra.mxu0 0.0
      %364 = vmatpush.msra.mxu0 0.0
      %365 = vmatpush.msra.mxu0 0.0
      %366 = vmatpush.msra.mxu0 0.0
      %367 = vmatpush.msra.mxu0 0.0
      %368 = vmatpush.msra.mxu0 0.0
      %369 = vmatpush.msra.mxu0 0.0
      %370 = vmatpush.msra.mxu0 0.0
      %371 = vmatpush.msra.mxu0 0.0
      %372 = vmatpush.msra.mxu0 0.0
      %373 = vmatpush.msra.mxu0 %v255
      %374 = vmatmul.f32.gmra.mxu0 %v356
      %v375 = vpop.f32.mrf.mxu0
      %v376 = vadd.f32 %v353, %v375
      %377 = vdwg.mxu0
      %378 = vmatpush.msra.mxu0 0.0
      %379 = vmatpush.msra.mxu0 0.0
      %380 = vmatpush.msra.mxu0 0.0
      %381 = vmatpush.msra.mxu0 0.0
      %382 = vmatpush.msra.mxu0 0.0
      %383 = vmatpush.msra.mxu0 0.0
      %384 = vmatpush.msra.mxu0 0.0
      %385 = vmatpush.msra.mxu0 0.0
      %386 = vmatpush.msra.mxu0 0.0
      %387 = vmatpush.msra.mxu0 0.0
      %388 = vmatpush.msra.mxu0 0.0
      %389 = vmatpush.msra.mxu0 0.0
      %390 = vmatpush.msra.mxu0 0.0
      %391 = vmatpush.msra.mxu0 0.0
      %392 = vmatpush.msra.mxu0 0.0
      %393 = vmatpush.msra.mxu0 %v278
      %394 = vmatmul.f32.gmra.mxu0 %v356
      %v395 = vpop.f32.mrf.mxu0
      %v396 = vadd.f32 %v353, %v395
      %397 = vdwg.mxu0
      %398 = vmatpush.msra.mxu0 0.0
      %399 = vmatpush.msra.mxu0 0.0
      %400 = vmatpush.msra.mxu0 0.0
      %401 = vmatpush.msra.mxu0 0.0
      %402 = vmatpush.msra.mxu0 0.0
      %403 = vmatpush.msra.mxu0 0.0
      %404 = vmatpush.msra.mxu0 0.0
      %405 = vmatpush.msra.mxu0 0.0
      %406 = vmatpush.msra.mxu0 0.0
      %407 = vmatpush.msra.mxu0 0.0
      %408 = vmatpush.msra.mxu0 0.0
      %409 = vmatpush.msra.mxu0 0.0
      %410 = vmatpush.msra.mxu0 0.0
      %411 = vmatpush.msra.mxu0 0.0
      %412 = vmatpush.msra.mxu0 0.0
      %413 = vmatpush.msra.mxu0 %v301
      %414 = vmatmul.f32.gmra.mxu0 %v356
      %v415 = vpop.f32.mrf.mxu0
      %v416 = vadd.f32 %v353, %v415
      %417 = vdwg.mxu0
      %418 = vmatpush.msra.mxu0 0.0
      %419 = vmatpush.msra.mxu0 0.0
      %420 = vmatpush.msra.mxu0 0.0
      %421 = vmatpush.msra.mxu0 0.0
      %422 = vmatpush.msra.mxu0 0.0
      %423 = vmatpush.msra.mxu0 0.0
      %424 = vmatpush.msra.mxu0 0.0
      %425 = vmatpush.msra.mxu0 0.0
      %426 = vmatpush.msra.mxu0 0.0
      %427 = vmatpush.msra.mxu0 0.0
      %428 = vmatpush.msra.mxu0 0.0
      %429 = vmatpush.msra.mxu0 0.0
      %430 = vmatpush.msra.mxu0 0.0
      %431 = vmatpush.msra.mxu0 0.0
      %432 = vmatpush.msra.mxu0 0.0
      %433 = vmatpush.msra.mxu0 %v324
      %434 = vmatmul.f32.gmra.mxu0 %v356
      %v435 = vpop.f32.mrf.mxu0
      %v436 = vadd.f32 %v353, %v435
      %437 = vdwg.mxu0
      %439 = vset.pattern.permute.xlu0 0
      %440 = vperm.xlu0 %439, %v235
      %v441 = vpop.permute.xlu0 %440
      %v444 = vsel %vm249, %v232, 0
      %446 = vmatpush.msra.mxu0 0.0
      %447 = vmatpush.msra.mxu0 0.0
      %448 = vmatpush.msra.mxu0 0.0
      %449 = vmatpush.msra.mxu0 0.0
      %450 = vmatpush.msra.mxu0 0.0
      %451 = vmatpush.msra.mxu0 0.0
      %452 = vmatpush.msra.mxu0 0.0
      %453 = vmatpush.msra.mxu0 0.0
      %454 = vmatpush.msra.mxu0 0.0
      %455 = vmatpush.msra.mxu0 0.0
      %456 = vmatpush.msra.mxu0 0.0
      %457 = vmatpush.msra.mxu0 0.0
      %458 = vmatpush.msra.mxu0 0.0
      %459 = vmatpush.msra.mxu0 0.0
      %460 = vmatpush.msra.mxu0 0.0
      %461 = vmatpush.msra.mxu0 %v255
      %462 = vmatmul.f32.gmra.mxu0 %v444
      %v463 = vpop.f32.mrf.mxu0
      %v464 = vadd.f32 %v441, %v463
      %465 = vdwg.mxu0
      %466 = vmatpush.msra.mxu0 0.0
      %467 = vmatpush.msra.mxu0 0.0
      %468 = vmatpush.msra.mxu0 0.0
      %469 = vmatpush.msra.mxu0 0.0
      %470 = vmatpush.msra.mxu0 0.0
      %471 = vmatpush.msra.mxu0 0.0
      %472 = vmatpush.msra.mxu0 0.0
      %473 = vmatpush.msra.mxu0 0.0
      %474 = vmatpush.msra.mxu0 0.0
      %475 = vmatpush.msra.mxu0 0.0
      %476 = vmatpush.msra.mxu0 0.0
      %477 = vmatpush.msra.mxu0 0.0
      %478 = vmatpush.msra.mxu0 0.0
      %479 = vmatpush.msra.mxu0 0.0
      %480 = vmatpush.msra.mxu0 0.0
      %481 = vmatpush.msra.mxu0 %v278
      %482 = vmatmul.f32.gmra.mxu0 %v444
      %v483 = vpop.f32.mrf.mxu0
      %v484 = vadd.f32 %v441, %v483
      %485 = vdwg.mxu0
      %486 = vmatpush.msra.mxu0 0.0
      %487 = vmatpush.msra.mxu0 0.0
      %488 = vmatpush.msra.mxu0 0.0
      %489 = vmatpush.msra.mxu0 0.0
      %490 = vmatpush.msra.mxu0 0.0
      %491 = vmatpush.msra.mxu0 0.0
      %492 = vmatpush.msra.mxu0 0.0
      %493 = vmatpush.msra.mxu0 0.0
      %494 = vmatpush.msra.mxu0 0.0
      %495 = vmatpush.msra.mxu0 0.0
      %496 = vmatpush.msra.mxu0 0.0
      %497 = vmatpush.msra.mxu0 0.0
      %498 = vmatpush.msra.mxu0 0.0
      %499 = vmatpush.msra.mxu0 0.0
      %500 = vmatpush.msra.mxu0 0.0
      %501 = vmatpush.msra.mxu0 %v301
      %502 = vmatmul.f32.gmra.mxu0 %v444
      %v503 = vpop.f32.mrf.mxu0
      %v504 = vadd.f32 %v441, %v503
      %505 = vdwg.mxu0
      %506 = vmatpush.msra.mxu0 0.0
      %507 = vmatpush.msra.mxu0 0.0
      %508 = vmatpush.msra.mxu0 0.0
      %509 = vmatpush.msra.mxu0 0.0
      %510 = vmatpush.msra.mxu0 0.0
      %511 = vmatpush.msra.mxu0 0.0
      %512 = vmatpush.msra.mxu0 0.0
      %513 = vmatpush.msra.mxu0 0.0
      %514 = vmatpush.msra.mxu0 0.0
      %515 = vmatpush.msra.mxu0 0.0
      %516 = vmatpush.msra.mxu0 0.0
      %517 = vmatpush.msra.mxu0 0.0
      %518 = vmatpush.msra.mxu0 0.0
      %519 = vmatpush.msra.mxu0 0.0
      %520 = vmatpush.msra.mxu0 0.0
      %521 = vmatpush.msra.mxu0 %v324
      %522 = vmatmul.f32.gmra.mxu0 %v444
      %v523 = vpop.f32.mrf.mxu0
      %v524 = vadd.f32 %v441, %v523
      %525 = vdwg.mxu0
      %v526 = vpack.c.bf16 %v346, %v346
      %v527 = vpack.c.bf16 %v347, %v347
      %v528 = vpack.c.bf16 %v348, %v348
      %v529 = vpack.c.bf16 %v349, %v349
      %v530 = vpack.c.bf16 %v376, %v376
      %v531 = vpack.c.bf16 %v396, %v396
      %v532 = vpack.c.bf16 %v416, %v416
      %v533 = vpack.c.bf16 %v436, %v436
      %v534 = vpack.c.bf16 %v464, %v464
      %v535 = vpack.c.bf16 %v484, %v484
      %v536 = vpack.c.bf16 %v504, %v504
      %v537 = vpack.c.bf16 %v524, %v524
      %538 = vxpose.xlu0.c.b16.start [1/8] %v526, 128
      %539 = vxpose.xlu0.c.b16.cont [2/8] 0, 128
      %540 = vxpose.xlu0.c.b16.cont [3/8] 0, 128
      %541 = vxpose.xlu0.c.b16.cont [4/8] 0, 128
      %542 = vxpose.xlu0.c.b16.cont [5/8] 0, 128
      %543 = vxpose.xlu0.c.b16.cont [6/8] 0, 128
      %544 = vxpose.xlu0.c.b16.cont [7/8] 0, 128
      %545 = vxpose.xlu0.c.b16.end [8/8] 0, 128
      %v546 = vpop.trf.xlu0
      %v547 = vpop.trf.xlu0
      %v548 = vpop.trf.xlu0
      %v549 = vpop.trf.xlu0
      %v550 = vpop.trf.xlu0
      %v551 = vpop.trf.xlu0
      %v552 = vpop.trf.xlu0
      %v553 = vpop.trf.xlu0
      %v555 = vsel %vm249, %v546, 0
      %vm557 = vcmask 1041408
      %v559 = vsel %vm557, %v530, 0
      %561 = vmatpush.bf16.msra.mxu0 0
      %562 = vmatpush.bf16.msra.mxu0 0
      %563 = vmatpush.bf16.msra.mxu0 0
      %564 = vmatpush.bf16.msra.mxu0 0
      %565 = vmatpush.bf16.msra.mxu0 0
      %566 = vmatpush.bf16.msra.mxu0 0
      %567 = vmatpush.bf16.msra.mxu0 0
      %568 = vmatpush.bf16.msra.mxu0 %v559
      %569 = vmatmul.bf16.gmra.mxu0 %v555
      %v570 = vpop.f32.mrf.mxu0
      %v571 = vadd.f32 0.0, %v570
      %v572 = vpop.f32.mrf.mxu0
      %v573 = vadd.f32 0.0, %v572
      %574 = vdwg.mxu0
      %575 = vxpose.xlu0.c.b16.start [1/8] %v527, 128
      %576 = vxpose.xlu0.c.b16.cont [2/8] 0, 128
      %577 = vxpose.xlu0.c.b16.cont [3/8] 0, 128
      %578 = vxpose.xlu0.c.b16.cont [4/8] 0, 128
      %579 = vxpose.xlu0.c.b16.cont [5/8] 0, 128
      %580 = vxpose.xlu0.c.b16.cont [6/8] 0, 128
      %581 = vxpose.xlu0.c.b16.cont [7/8] 0, 128
      %582 = vxpose.xlu0.c.b16.end [8/8] 0, 128
      %v583 = vpop.trf.xlu0
      %v584 = vpop.trf.xlu0
      %v585 = vpop.trf.xlu0
      %v586 = vpop.trf.xlu0
      %v587 = vpop.trf.xlu0
      %v588 = vpop.trf.xlu0
      %v589 = vpop.trf.xlu0
      %v590 = vpop.trf.xlu0
      %v592 = vsel %vm249, %v583, 0
      %v595 = vsel %vm557, %v531, 0
      %597 = vmatpush.bf16.msra.mxu0 0
      %598 = vmatpush.bf16.msra.mxu0 0
      %599 = vmatpush.bf16.msra.mxu0 0
      %600 = vmatpush.bf16.msra.mxu0 0
      %601 = vmatpush.bf16.msra.mxu0 0
      %602 = vmatpush.bf16.msra.mxu0 0
      %603 = vmatpush.bf16.msra.mxu0 0
      %604 = vmatpush.bf16.msra.mxu0 %v595
      %605 = vmatmul.bf16.gmra.mxu0 %v592
      %v606 = vpop.f32.mrf.mxu0
      %v607 = vadd.f32 0.0, %v606
      %v608 = vpop.f32.mrf.mxu0
      %v609 = vadd.f32 0.0, %v608
      %610 = vdwg.mxu0
      %611 = vxpose.xlu0.c.b16.start [1/8] %v528, 128
      %612 = vxpose.xlu0.c.b16.cont [2/8] 0, 128
      %613 = vxpose.xlu0.c.b16.cont [3/8] 0, 128
      %614 = vxpose.xlu0.c.b16.cont [4/8] 0, 128
      %615 = vxpose.xlu0.c.b16.cont [5/8] 0, 128
      %616 = vxpose.xlu0.c.b16.cont [6/8] 0, 128
      %617 = vxpose.xlu0.c.b16.cont [7/8] 0, 128
      %618 = vxpose.xlu0.c.b16.end [8/8] 0, 128
      %v619 = vpop.trf.xlu0
      %v620 = vpop.trf.xlu0
      %v621 = vpop.trf.xlu0
      %v622 = vpop.trf.xlu0
      %v623 = vpop.trf.xlu0
      %v624 = vpop.trf.xlu0
      %v625 = vpop.trf.xlu0
      %v626 = vpop.trf.xlu0
      %v628 = vsel %vm249, %v619, 0
      %v631 = vsel %vm557, %v532, 0
      %633 = vmatpush.bf16.msra.mxu0 0
      %634 = vmatpush.bf16.msra.mxu0 0
      %635 = vmatpush.bf16.msra.mxu0 0
      %636 = vmatpush.bf16.msra.mxu0 0
      %637 = vmatpush.bf16.msra.mxu0 0
      %638 = vmatpush.bf16.msra.mxu0 0
      %639 = vmatpush.bf16.msra.mxu0 0
      %640 = vmatpush.bf16.msra.mxu0 %v631
      %641 = vmatmul.bf16.gmra.mxu0 %v628
      %v642 = vpop.f32.mrf.mxu0
      %v643 = vadd.f32 0.0, %v642
      %v644 = vpop.f32.mrf.mxu0
      %v645 = vadd.f32 0.0, %v644
      %646 = vdwg.mxu0
      %647 = vxpose.xlu0.c.b16.start [1/8] %v529, 128
      %648 = vxpose.xlu0.c.b16.cont [2/8] 0, 128
      %649 = vxpose.xlu0.c.b16.cont [3/8] 0, 128
      %650 = vxpose.xlu0.c.b16.cont [4/8] 0, 128
      %651 = vxpose.xlu0.c.b16.cont [5/8] 0, 128
      %652 = vxpose.xlu0.c.b16.cont [6/8] 0, 128
      %653 = vxpose.xlu0.c.b16.cont [7/8] 0, 128
      %654 = vxpose.xlu0.c.b16.end [8/8] 0, 128
      %v655 = vpop.trf.xlu0
      %v656 = vpop.trf.xlu0
      %v657 = vpop.trf.xlu0
      %v658 = vpop.trf.xlu0
      %v659 = vpop.trf.xlu0
      %v660 = vpop.trf.xlu0
      %v661 = vpop.trf.xlu0
      %v662 = vpop.trf.xlu0
      %v664 = vsel %vm249, %v655, 0
      %v667 = vsel %vm557, %v533, 0
      %669 = vmatpush.bf16.msra.mxu0 0
      %670 = vmatpush.bf16.msra.mxu0 0
      %671 = vmatpush.bf16.msra.mxu0 0
      %672 = vmatpush.bf16.msra.mxu0 0
      %673 = vmatpush.bf16.msra.mxu0 0
      %674 = vmatpush.bf16.msra.mxu0 0
      %675 = vmatpush.bf16.msra.mxu0 0
      %676 = vmatpush.bf16.msra.mxu0 %v667
      %677 = vmatmul.bf16.gmra.mxu0 %v664
      %v678 = vpop.f32.mrf.mxu0
      %v679 = vadd.f32 0.0, %v678
      %v680 = vpop.f32.mrf.mxu0
      %v681 = vadd.f32 0.0, %v680
      %682 = vdwg.mxu0
      %vm683 = vcmask 130048
      %v684 = vsel %vm683, %v571, -inf
      %685 = vmax.xlane.f32.xlu0 %v684
      %v686 = vpop.xlane.xlu0 %685
      %v687 = vsel %vm683, %v573, -inf
      %688 = vmax.xlane.f32.xlu0 %v687
      %v689 = vpop.xlane.xlu0 %688
      %v690 = vsel %vm683, %v607, -inf
      %691 = vmax.xlane.f32.xlu0 %v690
      %v692 = vpop.xlane.xlu0 %691
      %v693 = vsel %vm683, %v609, -inf
      %694 = vmax.xlane.f32.xlu0 %v693
      %v695 = vpop.xlane.xlu0 %694
      %v696 = vsel %vm683, %v643, -inf
      %697 = vmax.xlane.f32.xlu0 %v696
      %v698 = vpop.xlane.xlu0 %697
      %v699 = vsel %vm683, %v645, -inf
      %700 = vmax.xlane.f32.xlu0 %v699
      %v701 = vpop.xlane.xlu0 %700
      %v702 = vsel %vm683, %v679, -inf
      %703 = vmax.xlane.f32.xlu0 %v702
      %v704 = vpop.xlane.xlu0 %703
      %v705 = vsel %vm683, %v681, -inf
      %706 = vmax.xlane.f32.xlu0 %v705
      %v707 = vpop.xlane.xlu0 %706
      %v708 = vsub.f32 %v571, %v686
      %v709 = vsub.f32 %v573, %v689
      %v710 = vsub.f32 %v607, %v692
      %v711 = vsub.f32 %v609, %v695
      %v712 = vsub.f32 %v643, %v698
      %v713 = vsub.f32 %v645, %v701
      %v714 = vsub.f32 %v679, %v704
      %v715 = vsub.f32 %v681, %v707
      %v716 = vmul.f32 %v708, 1.442695
      %v717 = vpow.pop %v716
      %v718 = vmul.f32 %v709, 1.442695
      %v719 = vpow.pop %v718
      %v720 = vmul.f32 %v710, 1.442695
      %v721 = vpow.pop %v720
      %v722 = vmul.f32 %v711, 1.442695
      %v723 = vpow.pop %v722
      %v724 = vmul.f32 %v712, 1.442695
      %v725 = vpow.pop %v724
      %v726 = vmul.f32 %v713, 1.442695
      %v727 = vpow.pop %v726
      %v728 = vmul.f32 %v714, 1.442695
      %v729 = vpow.pop %v728
      %v730 = vmul.f32 %v715, 1.442695
      %v731 = vpow.pop %v730
      %v732 = vsel %vm683, %v717, 0.0
      %733 = vadd.xlane.f32.xlu0 %v732
      %v734 = vpop.xlane.xlu0 %733
      %v735 = vsel %vm683, %v719, 0.0
      %736 = vadd.xlane.f32.xlu0 %v735
      %v737 = vpop.xlane.xlu0 %736
      %v738 = vsel %vm683, %v721, 0.0
      %739 = vadd.xlane.f32.xlu0 %v738
      %v740 = vpop.xlane.xlu0 %739
      %v741 = vsel %vm683, %v723, 0.0
      %742 = vadd.xlane.f32.xlu0 %v741
      %v743 = vpop.xlane.xlu0 %742
      %v744 = vsel %vm683, %v725, 0.0
      %745 = vadd.xlane.f32.xlu0 %v744
      %v746 = vpop.xlane.xlu0 %745
      %v747 = vsel %vm683, %v727, 0.0
      %748 = vadd.xlane.f32.xlu0 %v747
      %v749 = vpop.xlane.xlu0 %748
      %v750 = vsel %vm683, %v729, 0.0
      %751 = vadd.xlane.f32.xlu0 %v750
      %v752 = vpop.xlane.xlu0 %751
      %v753 = vsel %vm683, %v731, 0.0
      %754 = vadd.xlane.f32.xlu0 %v753
      %v755 = vpop.xlane.xlu0 %754
      %v756 = vrcp.pop %v734
      %v757 = vrcp.pop %v737
      %v758 = vrcp.pop %v740
      %v759 = vrcp.pop %v743
      %v760 = vrcp.pop %v746
      %v761 = vrcp.pop %v749
      %v762 = vrcp.pop %v752
      %v763 = vrcp.pop %v755
      %v764 = vmul.f32 %v717, %v756
      %v765 = vmul.f32 %v719, %v757
      %v766 = vmul.f32 %v721, %v758
      %v767 = vmul.f32 %v723, %v759
      %v768 = vmul.f32 %v725, %v760
      %v769 = vmul.f32 %v727, %v761
      %v770 = vmul.f32 %v729, %v762
      %v771 = vmul.f32 %v731, %v763
      %v772 = vpack.c.bf16 %v764, %v764
      %v773 = vpack.c.bf16 %v765, %v765
      %v774 = vpack.c.bf16 %v766, %v766
      %v775 = vpack.c.bf16 %v767, %v767
      %v776 = vpack.c.bf16 %v768, %v768
      %v777 = vpack.c.bf16 %v769, %v769
      %v778 = vpack.c.bf16 %v770, %v770
      %v779 = vpack.c.bf16 %v771, %v771
      %v781 = vsel %vm683, %v526, 0
      %v783 = vsel %vm683, %v530, 0
      %785 = vmatpush.bf16.xpose.msra.mxu0 0
      %786 = vmatpush.bf16.xpose.msra.mxu0 0
      %787 = vmatpush.bf16.xpose.msra.mxu0 0
      %788 = vmatpush.bf16.xpose.msra.mxu0 0
      %789 = vmatpush.bf16.xpose.msra.mxu0 0
      %790 = vmatpush.bf16.xpose.msra.mxu0 0
      %791 = vmatpush.bf16.xpose.msra.mxu0 0
      %792 = vmatpush.bf16.xpose.msra.mxu0 %v783
      %793 = vmatmul.bf16.gmra.mxu0 %v781
      %v794 = vpop.f32.mrf.mxu0
      %v795 = vadd.f32 0.0, %v794
      %v796 = vpop.f32.mrf.mxu0
      %797 = vdwg.mxu0
      %v799 = vsel %vm683, %v527, 0
      %v801 = vsel %vm683, %v531, 0
      %803 = vmatpush.bf16.xpose.msra.mxu0 0
      %804 = vmatpush.bf16.xpose.msra.mxu0 0
      %805 = vmatpush.bf16.xpose.msra.mxu0 0
      %806 = vmatpush.bf16.xpose.msra.mxu0 0
      %807 = vmatpush.bf16.xpose.msra.mxu0 0
      %808 = vmatpush.bf16.xpose.msra.mxu0 0
      %809 = vmatpush.bf16.xpose.msra.mxu0 0
      %810 = vmatpush.bf16.xpose.msra.mxu0 %v801
      %811 = vmatmul.bf16.gmra.mxu0 %v799
      %v812 = vpop.f32.mrf.mxu0
      %v813 = vadd.f32 0.0, %v812
      %v814 = vpop.f32.mrf.mxu0
      %815 = vdwg.mxu0
      %v817 = vsel %vm683, %v528, 0
      %v819 = vsel %vm683, %v532, 0
      %821 = vmatpush.bf16.xpose.msra.mxu0 0
      %822 = vmatpush.bf16.xpose.msra.mxu0 0
      %823 = vmatpush.bf16.xpose.msra.mxu0 0
      %824 = vmatpush.bf16.xpose.msra.mxu0 0
      %825 = vmatpush.bf16.xpose.msra.mxu0 0
      %826 = vmatpush.bf16.xpose.msra.mxu0 0
      %827 = vmatpush.bf16.xpose.msra.mxu0 0
      %828 = vmatpush.bf16.xpose.msra.mxu0 %v819
      %829 = vmatmul.bf16.gmra.mxu0 %v817
      %v830 = vpop.f32.mrf.mxu0
      %v831 = vadd.f32 0.0, %v830
      %v832 = vpop.f32.mrf.mxu0
      %833 = vdwg.mxu0
      %v835 = vsel %vm683, %v529, 0
      %v837 = vsel %vm683, %v533, 0
      %839 = vmatpush.bf16.xpose.msra.mxu0 0
      %840 = vmatpush.bf16.xpose.msra.mxu0 0
      %841 = vmatpush.bf16.xpose.msra.mxu0 0
      %842 = vmatpush.bf16.xpose.msra.mxu0 0
      %843 = vmatpush.bf16.xpose.msra.mxu0 0
      %844 = vmatpush.bf16.xpose.msra.mxu0 0
      %845 = vmatpush.bf16.xpose.msra.mxu0 0
      %846 = vmatpush.bf16.xpose.msra.mxu0 %v837
      %847 = vmatmul.bf16.gmra.mxu0 %v835
      %v848 = vpop.f32.mrf.mxu0
      %v849 = vadd.f32 0.0, %v848
      %v850 = vpop.f32.mrf.mxu0
      %851 = vdwg.mxu0
      %vm852 = vcmask 27648
      %v853 = vsel %vm852, %v795, -inf
      %854 = vmax.xlane.f32.xlu0 %v853
      %v855 = vpop.xlane.xlu0 %854
      %v856 = vsel %vm852, %v813, -inf
      %857 = vmax.xlane.f32.xlu0 %v856
      %v858 = vpop.xlane.xlu0 %857
      %v859 = vsel %vm852, %v831, -inf
      %860 = vmax.xlane.f32.xlu0 %v859
      %v861 = vpop.xlane.xlu0 %860
      %v862 = vsel %vm852, %v849, -inf
      %863 = vmax.xlane.f32.xlu0 %v862
      %v864 = vpop.xlane.xlu0 %863
      %v865 = vsub.f32 %v795, %v855
      %v866 = vsub.f32 %v813, %v858
      %v867 = vsub.f32 %v831, %v861
      %v868 = vsub.f32 %v849, %v864
      %v869 = vmul.f32 %v865, 1.442695
      %v870 = vpow.pop %v869
      %v871 = vmul.f32 %v866, 1.442695
      %v872 = vpow.pop %v871
      %v873 = vmul.f32 %v867, 1.442695
      %v874 = vpow.pop %v873
      %v875 = vmul.f32 %v868, 1.442695
      %v876 = vpow.pop %v875
      %v877 = vsel %vm852, %v870, 0.0
      %878 = vadd.xlane.f32.xlu0 %v877
      %v879 = vpop.xlane.xlu0 %878
      %v880 = vsel %vm852, %v872, 0.0
      %881 = vadd.xlane.f32.xlu0 %v880
      %v882 = vpop.xlane.xlu0 %881
      %v883 = vsel %vm852, %v874, 0.0
      %884 = vadd.xlane.f32.xlu0 %v883
      %v885 = vpop.xlane.xlu0 %884
      %v886 = vsel %vm852, %v876, 0.0
      %887 = vadd.xlane.f32.xlu0 %v886
      %v888 = vpop.xlane.xlu0 %887
      %v889 = vrcp.pop %v879
      %v890 = vrcp.pop %v882
      %v891 = vrcp.pop %v885
      %v892 = vrcp.pop %v888
      %v893 = vmul.f32 %v870, %v889
      %v894 = vmul.f32 %v872, %v890
      %v895 = vmul.f32 %v874, %v891
      %v896 = vmul.f32 %v876, %v892
      %v897 = vpack.c.bf16 %v893, %v893
      %v898 = vpack.c.bf16 %v894, %v894
      %v899 = vpack.c.bf16 %v895, %v895
      %v900 = vpack.c.bf16 %v896, %v896
      %v902 = vsel %vm249, %v897, 0
      %v905 = vsel %vm557, %v534, 0
      %907 = vmatpush.bf16.msra.mxu0 0
      %908 = vmatpush.bf16.msra.mxu0 0
      %909 = vmatpush.bf16.msra.mxu0 0
      %910 = vmatpush.bf16.msra.mxu0 0
      %911 = vmatpush.bf16.msra.mxu0 0
      %912 = vmatpush.bf16.msra.mxu0 0
      %913 = vmatpush.bf16.msra.mxu0 0
      %914 = vmatpush.bf16.msra.mxu0 %v905
      %915 = vmatmul.bf16.gmra.mxu0 %v902
      %v916 = vpop.f32.mrf.mxu0
      %v917 = vadd.f32 0.0, %v916
      %v918 = vpop.f32.mrf.mxu0
      %919 = vdwg.mxu0
      %v921 = vsel %vm249, %v898, 0
      %v924 = vsel %vm557, %v535, 0
      %926 = vmatpush.bf16.msra.mxu0 0
      %927 = vmatpush.bf16.msra.mxu0 0
      %928 = vmatpush.bf16.msra.mxu0 0
      %929 = vmatpush.bf16.msra.mxu0 0
      %930 = vmatpush.bf16.msra.mxu0 0
      %931 = vmatpush.bf16.msra.mxu0 0
      %932 = vmatpush.bf16.msra.mxu0 0
      %933 = vmatpush.bf16.msra.mxu0 %v924
      %934 = vmatmul.bf16.gmra.mxu0 %v921
      %v935 = vpop.f32.mrf.mxu0
      %v936 = vadd.f32 0.0, %v935
      %v937 = vpop.f32.mrf.mxu0
      %938 = vdwg.mxu0
      %v940 = vsel %vm249, %v899, 0
      %v943 = vsel %vm557, %v536, 0
      %945 = vmatpush.bf16.msra.mxu0 0
      %946 = vmatpush.bf16.msra.mxu0 0
      %947 = vmatpush.bf16.msra.mxu0 0
      %948 = vmatpush.bf16.msra.mxu0 0
      %949 = vmatpush.bf16.msra.mxu0 0
      %950 = vmatpush.bf16.msra.mxu0 0
      %951 = vmatpush.bf16.msra.mxu0 0
      %952 = vmatpush.bf16.msra.mxu0 %v943
      %953 = vmatmul.bf16.gmra.mxu0 %v940
      %v954 = vpop.f32.mrf.mxu0
      %v955 = vadd.f32 0.0, %v954
      %v956 = vpop.f32.mrf.mxu0
      %957 = vdwg.mxu0
      %v959 = vsel %vm249, %v900, 0
      %v962 = vsel %vm557, %v537, 0
      %964 = vmatpush.bf16.msra.mxu0 0
      %965 = vmatpush.bf16.msra.mxu0 0
      %966 = vmatpush.bf16.msra.mxu0 0
      %967 = vmatpush.bf16.msra.mxu0 0
      %968 = vmatpush.bf16.msra.mxu0 0
      %969 = vmatpush.bf16.msra.mxu0 0
      %970 = vmatpush.bf16.msra.mxu0 0
      %971 = vmatpush.bf16.msra.mxu0 %v962
      %972 = vmatmul.bf16.gmra.mxu0 %v959
      %v973 = vpop.f32.mrf.mxu0
      %v974 = vadd.f32 0.0, %v973
      %v975 = vpop.f32.mrf.mxu0
      %976 = vdwg.mxu0
      %v979 = vunpack.c.l.b16 %v772
      %v980 = vunpack.c.l.b16 %v773
      %v981 = vpack.c.b16 %v980, %v979
      %v982 = vsel %vm683, %v534, 0
      %v985 = vsel %vm683, %v981, 0
      %987 = vmatpush.bf16.xpose.msra.mxu0 0
      %988 = vmatpush.bf16.xpose.msra.mxu0 0
      %989 = vmatpush.bf16.xpose.msra.mxu0 0
      %990 = vmatpush.bf16.xpose.msra.mxu0 0
      %991 = vmatpush.bf16.xpose.msra.mxu0 0
      %992 = vmatpush.bf16.xpose.msra.mxu0 0
      %993 = vmatpush.bf16.xpose.msra.mxu0 0
      %994 = vmatpush.bf16.xpose.msra.mxu0 %v985
      %995 = vmatmul.bf16.gmra.mxu0 %v982
      %v996 = vpop.f32.mrf.mxu0
      %v997 = vadd.f32 %v917, %v996
      %v998 = vpop.f32.mrf.mxu0
      %999 = vdwg.mxu0
      %v1002 = vunpack.c.l.b16 %v774
      %v1003 = vunpack.c.l.b16 %v775
      %v1004 = vpack.c.b16 %v1003, %v1002
      %v1005 = vsel %vm683, %v535, 0
      %v1008 = vsel %vm683, %v1004, 0
      %1010 = vmatpush.bf16.xpose.msra.mxu0 0
      %1011 = vmatpush.bf16.xpose.msra.mxu0 0
      %1012 = vmatpush.bf16.xpose.msra.mxu0 0
      %1013 = vmatpush.bf16.xpose.msra.mxu0 0
      %1014 = vmatpush.bf16.xpose.msra.mxu0 0
      %1015 = vmatpush.bf16.xpose.msra.mxu0 0
      %1016 = vmatpush.bf16.xpose.msra.mxu0 0
      %1017 = vmatpush.bf16.xpose.msra.mxu0 %v1008
      %1018 = vmatmul.bf16.gmra.mxu0 %v1005
      %v1019 = vpop.f32.mrf.mxu0
      %v1020 = vadd.f32 %v936, %v1019
      %v1021 = vpop.f32.mrf.mxu0
      %1022 = vdwg.mxu0
      %v1025 = vunpack.c.l.b16 %v776
      %v1026 = vunpack.c.l.b16 %v777
      %v1027 = vpack.c.b16 %v1026, %v1025
      %v1028 = vsel %vm683, %v536, 0
      %v1031 = vsel %vm683, %v1027, 0
      %1033 = vmatpush.bf16.xpose.msra.mxu0 0
      %1034 = vmatpush.bf16.xpose.msra.mxu0 0
      %1035 = vmatpush.bf16.xpose.msra.mxu0 0
      %1036 = vmatpush.bf16.xpose.msra.mxu0 0
      %1037 = vmatpush.bf16.xpose.msra.mxu0 0
      %1038 = vmatpush.bf16.xpose.msra.mxu0 0
      %1039 = vmatpush.bf16.xpose.msra.mxu0 0
      %1040 = vmatpush.bf16.xpose.msra.mxu0 %v1031
      %1041 = vmatmul.bf16.gmra.mxu0 %v1028
      %v1042 = vpop.f32.mrf.mxu0
      %v1043 = vadd.f32 %v955, %v1042
      %v1044 = vpop.f32.mrf.mxu0
      %1045 = vdwg.mxu0
      %v1048 = vunpack.c.l.b16 %v778
      %v1049 = vunpack.c.l.b16 %v779
      %v1050 = vpack.c.b16 %v1049, %v1048
      %v1051 = vsel %vm683, %v537, 0
      %v1054 = vsel %vm683, %v1050, 0
      %1056 = vmatpush.bf16.xpose.msra.mxu0 0
      %1057 = vmatpush.bf16.xpose.msra.mxu0 0
      %1058 = vmatpush.bf16.xpose.msra.mxu0 0
      %1059 = vmatpush.bf16.xpose.msra.mxu0 0
      %1060 = vmatpush.bf16.xpose.msra.mxu0 0
      %1061 = vmatpush.bf16.xpose.msra.mxu0 0
      %1062 = vmatpush.bf16.xpose.msra.mxu0 0
      %1063 = vmatpush.bf16.xpose.msra.mxu0 %v1054
      %1064 = vmatmul.bf16.gmra.mxu0 %v1051
      %v1065 = vpop.f32.mrf.mxu0
      %v1066 = vadd.f32 %v974, %v1065
      %v1067 = vpop.f32.mrf.mxu0
      %1068 = vdwg.mxu0
      %1070 = vset.pattern.permute.xlu0 0
      %1071 = vperm.xlu0 %1070, %v242
      %v1072 = vpop.permute.xlu0 %1071
      %v1075 = vsel %vm249, %v237, 0
      %v1078 = vsel %vm253, %v997, 0
      %1080 = vmatpush.msra.mxu0 0.0
      %1081 = vmatpush.msra.mxu0 0.0
      %1082 = vmatpush.msra.mxu0 0.0
      %1083 = vmatpush.msra.mxu0 0.0
      %1084 = vmatpush.msra.mxu0 0.0
      %1085 = vmatpush.msra.mxu0 0.0
      %1086 = vmatpush.msra.mxu0 0.0
      %1087 = vmatpush.msra.mxu0 0.0
      %1088 = vmatpush.msra.mxu0 0.0
      %1089 = vmatpush.msra.mxu0 0.0
      %1090 = vmatpush.msra.mxu0 0.0
      %1091 = vmatpush.msra.mxu0 0.0
      %1092 = vmatpush.msra.mxu0 0.0
      %1093 = vmatpush.msra.mxu0 0.0
      %1094 = vmatpush.msra.mxu0 0.0
      %1095 = vmatpush.msra.mxu0 %v1078
      %1096 = vmatmul.f32.gmra.mxu0 %v1075
      %v1097 = vpop.f32.mrf.mxu0
      %v1098 = vadd.f32 %v1072, %v1097
      %1099 = vdwg.mxu0
      %v1101 = vsel %vm253, %v1020, 0
      %1103 = vmatpush.msra.mxu0 0.0
      %1104 = vmatpush.msra.mxu0 0.0
      %1105 = vmatpush.msra.mxu0 0.0
      %1106 = vmatpush.msra.mxu0 0.0
      %1107 = vmatpush.msra.mxu0 0.0
      %1108 = vmatpush.msra.mxu0 0.0
      %1109 = vmatpush.msra.mxu0 0.0
      %1110 = vmatpush.msra.mxu0 0.0
      %1111 = vmatpush.msra.mxu0 0.0
      %1112 = vmatpush.msra.mxu0 0.0
      %1113 = vmatpush.msra.mxu0 0.0
      %1114 = vmatpush.msra.mxu0 0.0
      %1115 = vmatpush.msra.mxu0 0.0
      %1116 = vmatpush.msra.mxu0 0.0
      %1117 = vmatpush.msra.mxu0 0.0
      %1118 = vmatpush.msra.mxu0 %v1101
      %1119 = vmatmul.f32.gmra.mxu0 %v1075
      %v1120 = vpop.f32.mrf.mxu0
      %v1121 = vadd.f32 %v1072, %v1120
      %1122 = vdwg.mxu0
      %v1124 = vsel %vm253, %v1043, 0
      %1126 = vmatpush.msra.mxu0 0.0
      %1127 = vmatpush.msra.mxu0 0.0
      %1128 = vmatpush.msra.mxu0 0.0
      %1129 = vmatpush.msra.mxu0 0.0
      %1130 = vmatpush.msra.mxu0 0.0
      %1131 = vmatpush.msra.mxu0 0.0
      %1132 = vmatpush.msra.mxu0 0.0
      %1133 = vmatpush.msra.mxu0 0.0
      %1134 = vmatpush.msra.mxu0 0.0
      %1135 = vmatpush.msra.mxu0 0.0
      %1136 = vmatpush.msra.mxu0 0.0
      %1137 = vmatpush.msra.mxu0 0.0
      %1138 = vmatpush.msra.mxu0 0.0
      %1139 = vmatpush.msra.mxu0 0.0
      %1140 = vmatpush.msra.mxu0 0.0
      %1141 = vmatpush.msra.mxu0 %v1124
      %1142 = vmatmul.f32.gmra.mxu0 %v1075
      %v1143 = vpop.f32.mrf.mxu0
      %v1144 = vadd.f32 %v1072, %v1143
      %1145 = vdwg.mxu0
      %v1147 = vsel %vm253, %v1066, 0
      %1149 = vmatpush.msra.mxu0 0.0
      %1150 = vmatpush.msra.mxu0 0.0
      %1151 = vmatpush.msra.mxu0 0.0
      %1152 = vmatpush.msra.mxu0 0.0
      %1153 = vmatpush.msra.mxu0 0.0
      %1154 = vmatpush.msra.mxu0 0.0
      %1155 = vmatpush.msra.mxu0 0.0
      %1156 = vmatpush.msra.mxu0 0.0
      %1157 = vmatpush.msra.mxu0 0.0
      %1158 = vmatpush.msra.mxu0 0.0
      %1159 = vmatpush.msra.mxu0 0.0
      %1160 = vmatpush.msra.mxu0 0.0
      %1161 = vmatpush.msra.mxu0 0.0
      %1162 = vmatpush.msra.mxu0 0.0
      %1163 = vmatpush.msra.mxu0 0.0
      %1164 = vmatpush.msra.mxu0 %v1147
      %1165 = vmatmul.f32.gmra.mxu0 %v1075
      %v1166 = vpop.f32.mrf.mxu0
      %v1167 = vadd.f32 %v1072, %v1166
      %1168 = vdwg.mxu0
      %v1170 = vsel %vm249, %v236, 0
      %v1173 = vsel %vm253, 0.0, 0
      %1175 = vmatpush.msra.mxu0 0.0
      %1176 = vmatpush.msra.mxu0 0.0
      %1177 = vmatpush.msra.mxu0 0.0
      %1178 = vmatpush.msra.mxu0 0.0
      %1179 = vmatpush.msra.mxu0 0.0
      %1180 = vmatpush.msra.mxu0 0.0
      %1181 = vmatpush.msra.mxu0 0.0
      %1182 = vmatpush.msra.mxu0 0.0
      %1183 = vmatpush.msra.mxu0 0.0
      %1184 = vmatpush.msra.mxu0 0.0
      %1185 = vmatpush.msra.mxu0 0.0
      %1186 = vmatpush.msra.mxu0 0.0
      %1187 = vmatpush.msra.mxu0 0.0
      %1188 = vmatpush.msra.mxu0 0.0
      %1189 = vmatpush.msra.mxu0 0.0
      %1190 = vmatpush.msra.mxu0 %v1173
      %1191 = vmatmul.f32.gmra.mxu0 %v1170
      %v1192 = vpop.f32.mrf.mxu0
      %v1193 = vadd.f32 0.0, %v1192
      %1194 = vdwg.mxu0
      %1195 = vmatpush.msra.mxu0 0.0
      %1196 = vmatpush.msra.mxu0 0.0
      %1197 = vmatpush.msra.mxu0 0.0
      %1198 = vmatpush.msra.mxu0 0.0
      %1199 = vmatpush.msra.mxu0 0.0
      %1200 = vmatpush.msra.mxu0 0.0
      %1201 = vmatpush.msra.mxu0 0.0
      %1202 = vmatpush.msra.mxu0 0.0
      %1203 = vmatpush.msra.mxu0 0.0
      %1204 = vmatpush.msra.mxu0 0.0
      %1205 = vmatpush.msra.mxu0 0.0
      %1206 = vmatpush.msra.mxu0 0.0
      %1207 = vmatpush.msra.mxu0 0.0
      %1208 = vmatpush.msra.mxu0 0.0
      %1209 = vmatpush.msra.mxu0 0.0
      %1210 = vmatpush.msra.mxu0 %v1078
      %1211 = vmatmul.f32.gmra.mxu0 %v1170
      %v1212 = vpop.f32.mrf.mxu0
      %v1213 = vadd.f32 0.0, %v1212
      %1214 = vdwg.mxu0
      %1215 = vmatpush.msra.mxu0 0.0
      %1216 = vmatpush.msra.mxu0 0.0
      %1217 = vmatpush.msra.mxu0 0.0
      %1218 = vmatpush.msra.mxu0 0.0
      %1219 = vmatpush.msra.mxu0 0.0
      %1220 = vmatpush.msra.mxu0 0.0
      %1221 = vmatpush.msra.mxu0 0.0
      %1222 = vmatpush.msra.mxu0 0.0
      %1223 = vmatpush.msra.mxu0 0.0
      %1224 = vmatpush.msra.mxu0 0.0
      %1225 = vmatpush.msra.mxu0 0.0
      %1226 = vmatpush.msra.mxu0 0.0
      %1227 = vmatpush.msra.mxu0 0.0
      %1228 = vmatpush.msra.mxu0 0.0
      %1229 = vmatpush.msra.mxu0 0.0
      %1230 = vmatpush.msra.mxu0 %v1101
      %1231 = vmatmul.f32.gmra.mxu0 %v1170
      %v1232 = vpop.f32.mrf.mxu0
      %v1233 = vadd.f32 0.0, %v1232
      %1234 = vdwg.mxu0
      %1235 = vmatpush.msra.mxu0 0.0
      %1236 = vmatpush.msra.mxu0 0.0
      %1237 = vmatpush.msra.mxu0 0.0
      %1238 = vmatpush.msra.mxu0 0.0
      %1239 = vmatpush.msra.mxu0 0.0
      %1240 = vmatpush.msra.mxu0 0.0
      %1241 = vmatpush.msra.mxu0 0.0
      %1242 = vmatpush.msra.mxu0 0.0
      %1243 = vmatpush.msra.mxu0 0.0
      %1244 = vmatpush.msra.mxu0 0.0
      %1245 = vmatpush.msra.mxu0 0.0
      %1246 = vmatpush.msra.mxu0 0.0
      %1247 = vmatpush.msra.mxu0 0.0
      %1248 = vmatpush.msra.mxu0 0.0
      %1249 = vmatpush.msra.mxu0 0.0
      %1250 = vmatpush.msra.mxu0 %v1124
      %1251 = vmatmul.f32.gmra.mxu0 %v1170
      %v1252 = vpop.f32.mrf.mxu0
      %v1253 = vadd.f32 0.0, %v1252
      %1254 = vdwg.mxu0
      %v1255 = vadd.f32 %v1098, %v1193
      %v1256 = vadd.f32 %v1121, %v1213
      %v1257 = vadd.f32 %v1144, %v1233
      %v1258 = vadd.f32 %v1167, %v1253
      %v1260 = vsel %vm249, %v238, 0
      %1262 = vmatpush.msra.mxu0 0.0
      %1263 = vmatpush.msra.mxu0 0.0
      %1264 = vmatpush.msra.mxu0 0.0
      %1265 = vmatpush.msra.mxu0 0.0
      %1266 = vmatpush.msra.mxu0 0.0
      %1267 = vmatpush.msra.mxu0 0.0
      %1268 = vmatpush.msra.mxu0 0.0
      %1269 = vmatpush.msra.mxu0 0.0
      %1270 = vmatpush.msra.mxu0 0.0
      %1271 = vmatpush.msra.mxu0 0.0
      %1272 = vmatpush.msra.mxu0 0.0
      %1273 = vmatpush.msra.mxu0 0.0
      %1274 = vmatpush.msra.mxu0 0.0
      %1275 = vmatpush.msra.mxu0 0.0
      %1276 = vmatpush.msra.mxu0 0.0
      %1277 = vmatpush.msra.mxu0 %v1101
      %1278 = vmatmul.f32.gmra.mxu0 %v1260
      %v1279 = vpop.f32.mrf.mxu0
      %v1280 = vadd.f32 0.0, %v1279
      %1281 = vdwg.mxu0
      %1282 = vmatpush.msra.mxu0 0.0
      %1283 = vmatpush.msra.mxu0 0.0
      %1284 = vmatpush.msra.mxu0 0.0
      %1285 = vmatpush.msra.mxu0 0.0
      %1286 = vmatpush.msra.mxu0 0.0
      %1287 = vmatpush.msra.mxu0 0.0
      %1288 = vmatpush.msra.mxu0 0.0
      %1289 = vmatpush.msra.mxu0 0.0
      %1290 = vmatpush.msra.mxu0 0.0
      %1291 = vmatpush.msra.mxu0 0.0
      %1292 = vmatpush.msra.mxu0 0.0
      %1293 = vmatpush.msra.mxu0 0.0
      %1294 = vmatpush.msra.mxu0 0.0
      %1295 = vmatpush.msra.mxu0 0.0
      %1296 = vmatpush.msra.mxu0 0.0
      %1297 = vmatpush.msra.mxu0 %v1124
      %1298 = vmatmul.f32.gmra.mxu0 %v1260
      %v1299 = vpop.f32.mrf.mxu0
      %v1300 = vadd.f32 0.0, %v1299
      %1301 = vdwg.mxu0
      %1302 = vmatpush.msra.mxu0 0.0
      %1303 = vmatpush.msra.mxu0 0.0
      %1304 = vmatpush.msra.mxu0 0.0
      %1305 = vmatpush.msra.mxu0 0.0
      %1306 = vmatpush.msra.mxu0 0.0
      %1307 = vmatpush.msra.mxu0 0.0
      %1308 = vmatpush.msra.mxu0 0.0
      %1309 = vmatpush.msra.mxu0 0.0
      %1310 = vmatpush.msra.mxu0 0.0
      %1311 = vmatpush.msra.mxu0 0.0
      %1312 = vmatpush.msra.mxu0 0.0
      %1313 = vmatpush.msra.mxu0 0.0
      %1314 = vmatpush.msra.mxu0 0.0
      %1315 = vmatpush.msra.mxu0 0.0
      %1316 = vmatpush.msra.mxu0 0.0
      %1317 = vmatpush.msra.mxu0 %v1147
      %1318 = vmatmul.f32.gmra.mxu0 %v1260
      %v1319 = vpop.f32.mrf.mxu0
      %v1320 = vadd.f32 0.0, %v1319
      %1321 = vdwg.mxu0
      %1322 = vmatpush.msra.mxu0 0.0
      %1323 = vmatpush.msra.mxu0 0.0
      %1324 = vmatpush.msra.mxu0 0.0
      %1325 = vmatpush.msra.mxu0 0.0
      %1326 = vmatpush.msra.mxu0 0.0
      %1327 = vmatpush.msra.mxu0 0.0
      %1328 = vmatpush.msra.mxu0 0.0
      %1329 = vmatpush.msra.mxu0 0.0
      %1330 = vmatpush.msra.mxu0 0.0
      %1331 = vmatpush.msra.mxu0 0.0
      %1332 = vmatpush.msra.mxu0 0.0
      %1333 = vmatpush.msra.mxu0 0.0
      %1334 = vmatpush.msra.mxu0 0.0
      %1335 = vmatpush.msra.mxu0 0.0
      %1336 = vmatpush.msra.mxu0 0.0
      %1337 = vmatpush.msra.mxu0 %v1173
      %1338 = vmatmul.f32.gmra.mxu0 %v1260
      %v1339 = vpop.f32.mrf.mxu0
      %v1340 = vadd.f32 0.0, %v1339
      %1341 = vdwg.mxu0
      %v1342 = vadd.f32 %v1255, %v1280
      %v1343 = vadd.f32 %v1256, %v1300
      %v1344 = vadd.f32 %v1257, %v1320
      %v1345 = vadd.f32 %v1258, %v1340
      %1347 = vset.pattern.permute.xlu0 0
      %1348 = vperm.xlu0 %1347, %v243
      %v1349 = vpop.permute.xlu0 %1348
      %v1352 = vsel %vm249, %v240, 0
      %1354 = vmatpush.msra.mxu0 0.0
      %1355 = vmatpush.msra.mxu0 0.0
      %1356 = vmatpush.msra.mxu0 0.0
      %1357 = vmatpush.msra.mxu0 0.0
      %1358 = vmatpush.msra.mxu0 0.0
      %1359 = vmatpush.msra.mxu0 0.0
      %1360 = vmatpush.msra.mxu0 0.0
      %1361 = vmatpush.msra.mxu0 0.0
      %1362 = vmatpush.msra.mxu0 0.0
      %1363 = vmatpush.msra.mxu0 0.0
      %1364 = vmatpush.msra.mxu0 0.0
      %1365 = vmatpush.msra.mxu0 0.0
      %1366 = vmatpush.msra.mxu0 0.0
      %1367 = vmatpush.msra.mxu0 0.0
      %1368 = vmatpush.msra.mxu0 0.0
      %1369 = vmatpush.msra.mxu0 %v1078
      %1370 = vmatmul.f32.gmra.mxu0 %v1352
      %v1371 = vpop.f32.mrf.mxu0
      %v1372 = vadd.f32 %v1349, %v1371
      %1373 = vdwg.mxu0
      %1374 = vmatpush.msra.mxu0 0.0
      %1375 = vmatpush.msra.mxu0 0.0
      %1376 = vmatpush.msra.mxu0 0.0
      %1377 = vmatpush.msra.mxu0 0.0
      %1378 = vmatpush.msra.mxu0 0.0
      %1379 = vmatpush.msra.mxu0 0.0
      %1380 = vmatpush.msra.mxu0 0.0
      %1381 = vmatpush.msra.mxu0 0.0
      %1382 = vmatpush.msra.mxu0 0.0
      %1383 = vmatpush.msra.mxu0 0.0
      %1384 = vmatpush.msra.mxu0 0.0
      %1385 = vmatpush.msra.mxu0 0.0
      %1386 = vmatpush.msra.mxu0 0.0
      %1387 = vmatpush.msra.mxu0 0.0
      %1388 = vmatpush.msra.mxu0 0.0
      %1389 = vmatpush.msra.mxu0 %v1101
      %1390 = vmatmul.f32.gmra.mxu0 %v1352
      %v1391 = vpop.f32.mrf.mxu0
      %v1392 = vadd.f32 %v1349, %v1391
      %1393 = vdwg.mxu0
      %1394 = vmatpush.msra.mxu0 0.0
      %1395 = vmatpush.msra.mxu0 0.0
      %1396 = vmatpush.msra.mxu0 0.0
      %1397 = vmatpush.msra.mxu0 0.0
      %1398 = vmatpush.msra.mxu0 0.0
      %1399 = vmatpush.msra.mxu0 0.0
      %1400 = vmatpush.msra.mxu0 0.0
      %1401 = vmatpush.msra.mxu0 0.0
      %1402 = vmatpush.msra.mxu0 0.0
      %1403 = vmatpush.msra.mxu0 0.0
      %1404 = vmatpush.msra.mxu0 0.0
      %1405 = vmatpush.msra.mxu0 0.0
      %1406 = vmatpush.msra.mxu0 0.0
      %1407 = vmatpush.msra.mxu0 0.0
      %1408 = vmatpush.msra.mxu0 0.0
      %1409 = vmatpush.msra.mxu0 %v1124
      %1410 = vmatmul.f32.gmra.mxu0 %v1352
      %v1411 = vpop.f32.mrf.mxu0
      %v1412 = vadd.f32 %v1349, %v1411
      %1413 = vdwg.mxu0
      %1414 = vmatpush.msra.mxu0 0.0
      %1415 = vmatpush.msra.mxu0 0.0
      %1416 = vmatpush.msra.mxu0 0.0
      %1417 = vmatpush.msra.mxu0 0.0
      %1418 = vmatpush.msra.mxu0 0.0
      %1419 = vmatpush.msra.mxu0 0.0
      %1420 = vmatpush.msra.mxu0 0.0
      %1421 = vmatpush.msra.mxu0 0.0
      %1422 = vmatpush.msra.mxu0 0.0
      %1423 = vmatpush.msra.mxu0 0.0
      %1424 = vmatpush.msra.mxu0 0.0
      %1425 = vmatpush.msra.mxu0 0.0
      %1426 = vmatpush.msra.mxu0 0.0
      %1427 = vmatpush.msra.mxu0 0.0
      %1428 = vmatpush.msra.mxu0 0.0
      %1429 = vmatpush.msra.mxu0 %v1147
      %1430 = vmatmul.f32.gmra.mxu0 %v1352
      %v1431 = vpop.f32.mrf.mxu0
      %v1432 = vadd.f32 %v1349, %v1431
      %1433 = vdwg.mxu0
      %v1435 = vsel %vm249, %v239, 0
      %1437 = vmatpush.msra.mxu0 0.0
      %1438 = vmatpush.msra.mxu0 0.0
      %1439 = vmatpush.msra.mxu0 0.0
      %1440 = vmatpush.msra.mxu0 0.0
      %1441 = vmatpush.msra.mxu0 0.0
      %1442 = vmatpush.msra.mxu0 0.0
      %1443 = vmatpush.msra.mxu0 0.0
      %1444 = vmatpush.msra.mxu0 0.0
      %1445 = vmatpush.msra.mxu0 0.0
      %1446 = vmatpush.msra.mxu0 0.0
      %1447 = vmatpush.msra.mxu0 0.0
      %1448 = vmatpush.msra.mxu0 0.0
      %1449 = vmatpush.msra.mxu0 0.0
      %1450 = vmatpush.msra.mxu0 0.0
      %1451 = vmatpush.msra.mxu0 0.0
      %1452 = vmatpush.msra.mxu0 %v1173
      %1453 = vmatmul.f32.gmra.mxu0 %v1435
      %v1454 = vpop.f32.mrf.mxu0
      %v1455 = vadd.f32 0.0, %v1454
      %1456 = vdwg.mxu0
      %1457 = vmatpush.msra.mxu0 0.0
      %1458 = vmatpush.msra.mxu0 0.0
      %1459 = vmatpush.msra.mxu0 0.0
      %1460 = vmatpush.msra.mxu0 0.0
      %1461 = vmatpush.msra.mxu0 0.0
      %1462 = vmatpush.msra.mxu0 0.0
      %1463 = vmatpush.msra.mxu0 0.0
      %1464 = vmatpush.msra.mxu0 0.0
      %1465 = vmatpush.msra.mxu0 0.0
      %1466 = vmatpush.msra.mxu0 0.0
      %1467 = vmatpush.msra.mxu0 0.0
      %1468 = vmatpush.msra.mxu0 0.0
      %1469 = vmatpush.msra.mxu0 0.0
      %1470 = vmatpush.msra.mxu0 0.0
      %1471 = vmatpush.msra.mxu0 0.0
      %1472 = vmatpush.msra.mxu0 %v1078
      %1473 = vmatmul.f32.gmra.mxu0 %v1435
      %v1474 = vpop.f32.mrf.mxu0
      %v1475 = vadd.f32 0.0, %v1474
      %1476 = vdwg.mxu0
      %1477 = vmatpush.msra.mxu0 0.0
      %1478 = vmatpush.msra.mxu0 0.0
      %1479 = vmatpush.msra.mxu0 0.0
      %1480 = vmatpush.msra.mxu0 0.0
      %1481 = vmatpush.msra.mxu0 0.0
      %1482 = vmatpush.msra.mxu0 0.0
      %1483 = vmatpush.msra.mxu0 0.0
      %1484 = vmatpush.msra.mxu0 0.0
      %1485 = vmatpush.msra.mxu0 0.0
      %1486 = vmatpush.msra.mxu0 0.0
      %1487 = vmatpush.msra.mxu0 0.0
      %1488 = vmatpush.msra.mxu0 0.0
      %1489 = vmatpush.msra.mxu0 0.0
      %1490 = vmatpush.msra.mxu0 0.0
      %1491 = vmatpush.msra.mxu0 0.0
      %1492 = vmatpush.msra.mxu0 %v1101
      %1493 = vmatmul.f32.gmra.mxu0 %v1435
      %v1494 = vpop.f32.mrf.mxu0
      %v1495 = vadd.f32 0.0, %v1494
      %1496 = vdwg.mxu0
      %1497 = vmatpush.msra.mxu0 0.0
      %1498 = vmatpush.msra.mxu0 0.0
      %1499 = vmatpush.msra.mxu0 0.0
      %1500 = vmatpush.msra.mxu0 0.0
      %1501 = vmatpush.msra.mxu0 0.0
      %1502 = vmatpush.msra.mxu0 0.0
      %1503 = vmatpush.msra.mxu0 0.0
      %1504 = vmatpush.msra.mxu0 0.0
      %1505 = vmatpush.msra.mxu0 0.0
      %1506 = vmatpush.msra.mxu0 0.0
      %1507 = vmatpush.msra.mxu0 0.0
      %1508 = vmatpush.msra.mxu0 0.0
      %1509 = vmatpush.msra.mxu0 0.0
      %1510 = vmatpush.msra.mxu0 0.0
      %1511 = vmatpush.msra.mxu0 0.0
      %1512 = vmatpush.msra.mxu0 %v1124
      %1513 = vmatmul.f32.gmra.mxu0 %v1435
      %v1514 = vpop.f32.mrf.mxu0
      %v1515 = vadd.f32 0.0, %v1514
      %1516 = vdwg.mxu0
      %v1517 = vadd.f32 %v1372, %v1455
      %v1518 = vadd.f32 %v1392, %v1475
      %v1519 = vadd.f32 %v1412, %v1495
      %v1520 = vadd.f32 %v1432, %v1515
      %v1522 = vsel %vm249, %v241, 0
      %1524 = vmatpush.msra.mxu0 0.0
      %1525 = vmatpush.msra.mxu0 0.0
      %1526 = vmatpush.msra.mxu0 0.0
      %1527 = vmatpush.msra.mxu0 0.0
      %1528 = vmatpush.msra.mxu0 0.0
      %1529 = vmatpush.msra.mxu0 0.0
      %1530 = vmatpush.msra.mxu0 0.0
      %1531 = vmatpush.msra.mxu0 0.0
      %1532 = vmatpush.msra.mxu0 0.0
      %1533 = vmatpush.msra.mxu0 0.0
      %1534 = vmatpush.msra.mxu0 0.0
      %1535 = vmatpush.msra.mxu0 0.0
      %1536 = vmatpush.msra.mxu0 0.0
      %1537 = vmatpush.msra.mxu0 0.0
      %1538 = vmatpush.msra.mxu0 0.0
      %1539 = vmatpush.msra.mxu0 %v1101
      %1540 = vmatmul.f32.gmra.mxu0 %v1522
      %v1541 = vpop.f32.mrf.mxu0
      %v1542 = vadd.f32 0.0, %v1541
      %1543 = vdwg.mxu0
      %1544 = vmatpush.msra.mxu0 0.0
      %1545 = vmatpush.msra.mxu0 0.0
      %1546 = vmatpush.msra.mxu0 0.0
      %1547 = vmatpush.msra.mxu0 0.0
      %1548 = vmatpush.msra.mxu0 0.0
      %1549 = vmatpush.msra.mxu0 0.0
      %1550 = vmatpush.msra.mxu0 0.0
      %1551 = vmatpush.msra.mxu0 0.0
      %1552 = vmatpush.msra.mxu0 0.0
      %1553 = vmatpush.msra.mxu0 0.0
      %1554 = vmatpush.msra.mxu0 0.0
      %1555 = vmatpush.msra.mxu0 0.0
      %1556 = vmatpush.msra.mxu0 0.0
      %1557 = vmatpush.msra.mxu0 0.0
      %1558 = vmatpush.msra.mxu0 0.0
      %1559 = vmatpush.msra.mxu0 %v1124
      %1560 = vmatmul.f32.gmra.mxu0 %v1522
      %v1561 = vpop.f32.mrf.mxu0
      %v1562 = vadd.f32 0.0, %v1561
      %1563 = vdwg.mxu0
      %1564 = vmatpush.msra.mxu0 0.0
      %1565 = vmatpush.msra.mxu0 0.0
      %1566 = vmatpush.msra.mxu0 0.0
      %1567 = vmatpush.msra.mxu0 0.0
      %1568 = vmatpush.msra.mxu0 0.0
      %1569 = vmatpush.msra.mxu0 0.0
      %1570 = vmatpush.msra.mxu0 0.0
      %1571 = vmatpush.msra.mxu0 0.0
      %1572 = vmatpush.msra.mxu0 0.0
      %1573 = vmatpush.msra.mxu0 0.0
      %1574 = vmatpush.msra.mxu0 0.0
      %1575 = vmatpush.msra.mxu0 0.0
      %1576 = vmatpush.msra.mxu0 0.0
      %1577 = vmatpush.msra.mxu0 0.0
      %1578 = vmatpush.msra.mxu0 0.0
      %1579 = vmatpush.msra.mxu0 %v1147
      %1580 = vmatmul.f32.gmra.mxu0 %v1522
      %v1581 = vpop.f32.mrf.mxu0
      %v1582 = vadd.f32 0.0, %v1581
      %1583 = vdwg.mxu0
      %1584 = vmatpush.msra.mxu0 0.0
      %1585 = vmatpush.msra.mxu0 0.0
      %1586 = vmatpush.msra.mxu0 0.0
      %1587 = vmatpush.msra.mxu0 0.0
      %1588 = vmatpush.msra.mxu0 0.0
      %1589 = vmatpush.msra.mxu0 0.0
      %1590 = vmatpush.msra.mxu0 0.0
      %1591 = vmatpush.msra.mxu0 0.0
      %1592 = vmatpush.msra.mxu0 0.0
      %1593 = vmatpush.msra.mxu0 0.0
      %1594 = vmatpush.msra.mxu0 0.0
      %1595 = vmatpush.msra.mxu0 0.0
      %1596 = vmatpush.msra.mxu0 0.0
      %1597 = vmatpush.msra.mxu0 0.0
      %1598 = vmatpush.msra.mxu0 0.0
      %1599 = vmatpush.msra.mxu0 %v1173
      %1600 = vmatmul.f32.gmra.mxu0 %v1522
      %v1601 = vpop.f32.mrf.mxu0
      %v1602 = vadd.f32 0.0, %v1601
      %1603 = vdwg.mxu0
      %v1604 = vadd.f32 %v1517, %v1542
      %v1605 = vadd.f32 %v1518, %v1562
      %v1606 = vadd.f32 %v1519, %v1582
      %v1607 = vadd.f32 %v1520, %v1602
      %v1608 = vmul.f32 %v1342, %v1604
      %v1609 = vmul.f32 %v1342, %v1605
      %v1610 = vmul.f32 %v1342, %v1606
      %v1611 = vmul.f32 %v1342, %v1607
      %vm1612 = vcmask 125952
      %v1613 = vsel %vm1612, %v1608, 0.0
      %1614 = vadd.xlane.f32.xlu0 %v1613
      %v1615 = vpop.xlane.xlu0 %1614
      %v1616 = vsel %vm1612, %v1609, 0.0
      %1617 = vadd.xlane.f32.xlu0 %v1616
      %v1618 = vpop.xlane.xlu0 %1617
      %v1619 = vsel %vm1612, %v1610, 0.0
      %1620 = vadd.xlane.f32.xlu0 %v1619
      %v1621 = vpop.xlane.xlu0 %1620
      %v1622 = vsel %vm1612, %v1611, 0.0
      %1623 = vadd.xlane.f32.xlu0 %v1622
      %v1624 = vpop.xlane.xlu0 %1623
      %v1625 = vsel %vm253, %v1615, 0.0
      %v1626 = vrot.slane %v1625, 4
      %v1627 = vadd.f32 %v1625, %v1626
      %v1628 = vrot.slane %v1627, 2
      %v1629 = vadd.f32 %v1627, %v1628
      %v1630 = vrot.slane %v1629, 1
      %v1631 = vadd.f32 %v1629, %v1630
      %v1632 = vsel %vm253, %v1618, 0.0
      %v1633 = vrot.slane %v1632, 4
      %v1634 = vadd.f32 %v1632, %v1633
      %v1635 = vrot.slane %v1634, 2
      %v1636 = vadd.f32 %v1634, %v1635
      %v1637 = vrot.slane %v1636, 1
      %v1638 = vadd.f32 %v1636, %v1637
      %v1639 = vsel %vm253, %v1621, 0.0
      %v1640 = vrot.slane %v1639, 4
      %v1641 = vadd.f32 %v1639, %v1640
      %v1642 = vrot.slane %v1641, 2
      %v1643 = vadd.f32 %v1641, %v1642
      %v1644 = vrot.slane %v1643, 1
      %v1645 = vadd.f32 %v1643, %v1644
      %v1646 = vsel %vm253, %v1624, 0.0
      %v1647 = vrot.slane %v1646, 4
      %v1648 = vadd.f32 %v1646, %v1647
      %v1649 = vrot.slane %v1648, 2
      %v1650 = vadd.f32 %v1648, %v1649
      %v1651 = vrot.slane %v1650, 1
      %v1652 = vadd.f32 %v1650, %v1651
      %v1653 = vmax.f32 %v1631, %v1638
      %v1654 = vmax.f32 %v1645, %v1652
      %v1655 = vmax.f32 %v1653, %v1654
      %v1656 = vsub.f32 %v1631, %v1655
      %v1657 = vsub.f32 %v1638, %v1655
      %v1658 = vsub.f32 %v1645, %v1655
      %v1659 = vsub.f32 %v1652, %v1655
      %v1660 = vmul.f32 %v1656, 1.442695
      %v1661 = vpow.pop %v1660
      %v1662 = vmul.f32 %v1657, 1.442695
      %v1663 = vpow.pop %v1662
      %v1664 = vmul.f32 %v1658, 1.442695
      %v1665 = vpow.pop %v1664
      %v1666 = vmul.f32 %v1659, 1.442695
      %v1667 = vpow.pop %v1666
      %v1668 = vadd.f32 %v1661, %v1663
      %v1669 = vadd.f32 %v1668, %v1665
      %v1670 = vadd.f32 %v1669, %v1667
      %v1671 = vrcp.pop %v1670
      %v1672 = vmul.f32 %v1661, %v1671
      %v1673 = vmul.f32 %v1663, %v1671
      %v1674 = vmul.f32 %v1665, %v1671
      %v1675 = vmul.f32 %v1667, %v1671
      %v1676 = vmul.f32 %v1672, %v464
      %v1677 = vmul.f32 %v1673, %v484
      %v1678 = vmul.f32 %v1674, %v504
      %v1679 = vmul.f32 %v1675, %v524
      %v1680 = vsel %vm1612, %v1676, 0.0
      %v1681 = vsel %vm1612, %v1677, 0.0
      %v1682 = vadd.f32 %v1680, %v1681
      %v1683 = vsel %vm1612, %v1678, 0.0
      %v1684 = vadd.f32 %v1682, %v1683
      %v1685 = vsel %vm1612, %v1679, 0.0
      %v1686 = vadd.f32 %v1684, %v1685
      %1687 = vst.msk [vmem:[%s224] sm:$0xf] %vm1612, %v1686
      %v1688 = vmul.f32 %v1343, %v1604
      %v1689 = vmul.f32 %v1343, %v1605
      %v1690 = vmul.f32 %v1343, %v1606
      %v1691 = vmul.f32 %v1343, %v1607
      %v1692 = vsel %vm1612, %v1688, 0.0
      %1693 = vadd.xlane.f32.xlu0 %v1692
      %v1694 = vpop.xlane.xlu0 %1693
      %v1695 = vsel %vm1612, %v1689, 0.0
      %1696 = vadd.xlane.f32.xlu0 %v1695
      %v1697 = vpop.xlane.xlu0 %1696
      %v1698 = vsel %vm1612, %v1690, 0.0
      %1699 = vadd.xlane.f32.xlu0 %v1698
      %v1700 = vpop.xlane.xlu0 %1699
      %v1701 = vsel %vm1612, %v1691, 0.0
      %1702 = vadd.xlane.f32.xlu0 %v1701
      %v1703 = vpop.xlane.xlu0 %1702
      %v1704 = vsel %vm253, %v1694, 0.0
      %v1705 = vrot.slane %v1704, 4
      %v1706 = vadd.f32 %v1704, %v1705
      %v1707 = vrot.slane %v1706, 2
      %v1708 = vadd.f32 %v1706, %v1707
      %v1709 = vrot.slane %v1708, 1
      %v1710 = vadd.f32 %v1708, %v1709
      %v1711 = vsel %vm253, %v1697, 0.0
      %v1712 = vrot.slane %v1711, 4
      %v1713 = vadd.f32 %v1711, %v1712
      %v1714 = vrot.slane %v1713, 2
      %v1715 = vadd.f32 %v1713, %v1714
      %v1716 = vrot.slane %v1715, 1
      %v1717 = vadd.f32 %v1715, %v1716
      %v1718 = vsel %vm253, %v1700, 0.0
      %v1719 = vrot.slane %v1718, 4
      %v1720 = vadd.f32 %v1718, %v1719
      %v1721 = vrot.slane %v1720, 2
      %v1722 = vadd.f32 %v1720, %v1721
      %v1723 = vrot.slane %v1722, 1
      %v1724 = vadd.f32 %v1722, %v1723
      %v1725 = vsel %vm253, %v1703, 0.0
      %v1726 = vrot.slane %v1725, 4
      %v1727 = vadd.f32 %v1725, %v1726
      %v1728 = vrot.slane %v1727, 2
      %v1729 = vadd.f32 %v1727, %v1728
      %v1730 = vrot.slane %v1729, 1
      %v1731 = vadd.f32 %v1729, %v1730
      %v1732 = vmax.f32 %v1710, %v1717
      %v1733 = vmax.f32 %v1724, %v1731
      %v1734 = vmax.f32 %v1732, %v1733
      %v1735 = vsub.f32 %v1710, %v1734
      %v1736 = vsub.f32 %v1717, %v1734
      %v1737 = vsub.f32 %v1724, %v1734
      %v1738 = vsub.f32 %v1731, %v1734
      %v1739 = vmul.f32 %v1735, 1.442695
      %v1740 = vpow.pop %v1739
      %v1741 = vmul.f32 %v1736, 1.442695
      %v1742 = vpow.pop %v1741
      %v1743 = vmul.f32 %v1737, 1.442695
      %v1744 = vpow.pop %v1743
      %v1745 = vmul.f32 %v1738, 1.442695
      %v1746 = vpow.pop %v1745
      %v1747 = vadd.f32 %v1740, %v1742
      %v1748 = vadd.f32 %v1747, %v1744
      %v1749 = vadd.f32 %v1748, %v1746
      %v1750 = vrcp.pop %v1749
      %v1751 = vmul.f32 %v1740, %v1750
      %v1752 = vmul.f32 %v1742, %v1750
      %v1753 = vmul.f32 %v1744, %v1750
      %v1754 = vmul.f32 %v1746, %v1750
      %v1755 = vmul.f32 %v1751, %v464
      %v1756 = vmul.f32 %v1752, %v484
      %v1757 = vmul.f32 %v1753, %v504
      %v1758 = vmul.f32 %v1754, %v524
      %v1759 = vsel %vm1612, %v1755, 0.0
      %v1760 = vsel %vm1612, %v1756, 0.0
      %v1761 = vadd.f32 %v1759, %v1760
      %v1762 = vsel %vm1612, %v1757, 0.0
      %v1763 = vadd.f32 %v1761, %v1762
      %v1764 = vsel %vm1612, %v1758, 0.0
      %v1765 = vadd.f32 %v1763, %v1764
      %s1766 = scalar_lea.vmem %s224, 4
      %1767 = vst.msk [vmem:[%s1766] sm:$0xf] %vm1612, %v1765
      %v1768 = vmul.f32 %v1344, %v1604
      %v1769 = vmul.f32 %v1344, %v1605
      %v1770 = vmul.f32 %v1344, %v1606
      %v1771 = vmul.f32 %v1344, %v1607
      %v1772 = vsel %vm1612, %v1768, 0.0
      %1773 = vadd.xlane.f32.xlu0 %v1772
      %v1774 = vpop.xlane.xlu0 %1773
      %v1775 = vsel %vm1612, %v1769, 0.0
      %1776 = vadd.xlane.f32.xlu0 %v1775
      %v1777 = vpop.xlane.xlu0 %1776
      %v1778 = vsel %vm1612, %v1770, 0.0
      %1779 = vadd.xlane.f32.xlu0 %v1778
      %v1780 = vpop.xlane.xlu0 %1779
      %v1781 = vsel %vm1612, %v1771, 0.0
      %1782 = vadd.xlane.f32.xlu0 %v1781
      %v1783 = vpop.xlane.xlu0 %1782
      %v1784 = vsel %vm253, %v1774, 0.0
      %v1785 = vrot.slane %v1784, 4
      %v1786 = vadd.f32 %v1784, %v1785
      %v1787 = vrot.slane %v1786, 2
      %v1788 = vadd.f32 %v1786, %v1787
      %v1789 = vrot.slane %v1788, 1
      %v1790 = vadd.f32 %v1788, %v1789
      %v1791 = vsel %vm253, %v1777, 0.0
      %v1792 = vrot.slane %v1791, 4
      %v1793 = vadd.f32 %v1791, %v1792
      %v1794 = vrot.slane %v1793, 2
      %v1795 = vadd.f32 %v1793, %v1794
      %v1796 = vrot.slane %v1795, 1
      %v1797 = vadd.f32 %v1795, %v1796
      %v1798 = vsel %vm253, %v1780, 0.0
      %v1799 = vrot.slane %v1798, 4
      %v1800 = vadd.f32 %v1798, %v1799
      %v1801 = vrot.slane %v1800, 2
      %v1802 = vadd.f32 %v1800, %v1801
      %v1803 = vrot.slane %v1802, 1
      %v1804 = vadd.f32 %v1802, %v1803
      %v1805 = vsel %vm253, %v1783, 0.0
      %v1806 = vrot.slane %v1805, 4
      %v1807 = vadd.f32 %v1805, %v1806
      %v1808 = vrot.slane %v1807, 2
      %v1809 = vadd.f32 %v1807, %v1808
      %v1810 = vrot.slane %v1809, 1
      %v1811 = vadd.f32 %v1809, %v1810
      %v1812 = vmax.f32 %v1790, %v1797
      %v1813 = vmax.f32 %v1804, %v1811
      %v1814 = vmax.f32 %v1812, %v1813
      %v1815 = vsub.f32 %v1790, %v1814
      %v1816 = vsub.f32 %v1797, %v1814
      %v1817 = vsub.f32 %v1804, %v1814
      %v1818 = vsub.f32 %v1811, %v1814
      %v1819 = vmul.f32 %v1815, 1.442695
      %v1820 = vpow.pop %v1819
      %v1821 = vmul.f32 %v1816, 1.442695
      %v1822 = vpow.pop %v1821
      %v1823 = vmul.f32 %v1817, 1.442695
      %v1824 = vpow.pop %v1823
      %v1825 = vmul.f32 %v1818, 1.442695
      %v1826 = vpow.pop %v1825
      %v1827 = vadd.f32 %v1820, %v1822
      %v1828 = vadd.f32 %v1827, %v1824
      %v1829 = vadd.f32 %v1828, %v1826
      %v1830 = vrcp.pop %v1829
      %v1831 = vmul.f32 %v1820, %v1830
      %v1832 = vmul.f32 %v1822, %v1830
      %v1833 = vmul.f32 %v1824, %v1830
      %v1834 = vmul.f32 %v1826, %v1830
      %v1835 = vmul.f32 %v1831, %v464
      %v1836 = vmul.f32 %v1832, %v484
      %v1837 = vmul.f32 %v1833, %v504
      %v1838 = vmul.f32 %v1834, %v524
      %v1839 = vsel %vm1612, %v1835, 0.0
      %v1840 = vsel %vm1612, %v1836, 0.0
      %v1841 = vadd.f32 %v1839, %v1840
      %v1842 = vsel %vm1612, %v1837, 0.0
      %v1843 = vadd.f32 %v1841, %v1842
      %v1844 = vsel %vm1612, %v1838, 0.0
      %v1845 = vadd.f32 %v1843, %v1844
      %s1846 = scalar_lea.vmem %s224, 8
      %1847 = vst.msk [vmem:[%s1846] sm:$0xf] %vm1612, %v1845
      %v1848 = vmul.f32 %v1345, %v1604
      %v1849 = vmul.f32 %v1345, %v1605
      %v1850 = vmul.f32 %v1345, %v1606
      %v1851 = vmul.f32 %v1345, %v1607
      %v1852 = vsel %vm1612, %v1848, 0.0
      %1853 = vadd.xlane.f32.xlu0 %v1852
      %v1854 = vpop.xlane.xlu0 %1853
      %v1855 = vsel %vm1612, %v1849, 0.0
      %1856 = vadd.xlane.f32.xlu0 %v1855
      %v1857 = vpop.xlane.xlu0 %1856
      %v1858 = vsel %vm1612, %v1850, 0.0
      %1859 = vadd.xlane.f32.xlu0 %v1858
      %v1860 = vpop.xlane.xlu0 %1859
      %v1861 = vsel %vm1612, %v1851, 0.0
      %1862 = vadd.xlane.f32.xlu0 %v1861
      %v1863 = vpop.xlane.xlu0 %1862
      %v1864 = vsel %vm253, %v1854, 0.0
      %v1865 = vrot.slane %v1864, 4
      %v1866 = vadd.f32 %v1864, %v1865
      %v1867 = vrot.slane %v1866, 2
      %v1868 = vadd.f32 %v1866, %v1867
      %v1869 = vrot.slane %v1868, 1
      %v1870 = vadd.f32 %v1868, %v1869
      %v1871 = vsel %vm253, %v1857, 0.0
      %v1872 = vrot.slane %v1871, 4
      %v1873 = vadd.f32 %v1871, %v1872
      %v1874 = vrot.slane %v1873, 2
      %v1875 = vadd.f32 %v1873, %v1874
      %v1876 = vrot.slane %v1875, 1
      %v1877 = vadd.f32 %v1875, %v1876
      %v1878 = vsel %vm253, %v1860, 0.0
      %v1879 = vrot.slane %v1878, 4
      %v1880 = vadd.f32 %v1878, %v1879
      %v1881 = vrot.slane %v1880, 2
      %v1882 = vadd.f32 %v1880, %v1881
      %v1883 = vrot.slane %v1882, 1
      %v1884 = vadd.f32 %v1882, %v1883
      %v1885 = vsel %vm253, %v1863, 0.0
      %v1886 = vrot.slane %v1885, 4
      %v1887 = vadd.f32 %v1885, %v1886
      %v1888 = vrot.slane %v1887, 2
      %v1889 = vadd.f32 %v1887, %v1888
      %v1890 = vrot.slane %v1889, 1
      %v1891 = vadd.f32 %v1889, %v1890
      %v1892 = vmax.f32 %v1870, %v1877
      %v1893 = vmax.f32 %v1884, %v1891
      %v1894 = vmax.f32 %v1892, %v1893
      %v1895 = vsub.f32 %v1870, %v1894
      %v1896 = vsub.f32 %v1877, %v1894
      %v1897 = vsub.f32 %v1884, %v1894
      %v1898 = vsub.f32 %v1891, %v1894
      %v1899 = vmul.f32 %v1895, 1.442695
      %v1900 = vpow.pop %v1899
      %v1901 = vmul.f32 %v1896, 1.442695
      %v1902 = vpow.pop %v1901
      %v1903 = vmul.f32 %v1897, 1.442695
      %v1904 = vpow.pop %v1903
      %v1905 = vmul.f32 %v1898, 1.442695
      %v1906 = vpow.pop %v1905
      %v1907 = vadd.f32 %v1900, %v1902
      %v1908 = vadd.f32 %v1907, %v1904
      %v1909 = vadd.f32 %v1908, %v1906
      %v1910 = vrcp.pop %v1909
      %v1911 = vmul.f32 %v1900, %v1910
      %v1912 = vmul.f32 %v1902, %v1910
      %v1913 = vmul.f32 %v1904, %v1910
      %v1914 = vmul.f32 %v1906, %v1910
      %v1915 = vmul.f32 %v1911, %v464
      %v1916 = vmul.f32 %v1912, %v484
      %v1917 = vmul.f32 %v1913, %v504
      %v1918 = vmul.f32 %v1914, %v524
      %v1919 = vsel %vm1612, %v1915, 0.0
      %v1920 = vsel %vm1612, %v1916, 0.0
      %v1921 = vadd.f32 %v1919, %v1920
      %v1922 = vsel %vm1612, %v1917, 0.0
      %v1923 = vadd.f32 %v1921, %v1922
      %v1924 = vsel %vm1612, %v1918, 0.0
      %v1925 = vadd.f32 %v1923, %v1924
      %s1926 = scalar_lea.vmem %s224, 12
      %1927 = vst.msk [vmem:[%s1926] sm:$0xf] %vm1612, %v1925
      %p1928 = scmp.lt.s32.totalorder %s16, 1
      %s1929 = scalar_select %p1928, %s16, 1
      %s1930 = smul.addr %s1929, 4
      %s1931 = smul.addr %s1930, 4
      %s1932 = scalar_lea.vmem %s5, %s1931
      // Predicated region
      $region41: #{sada_forward.3} parent=39 // pred_check
        %p1933 = pneg %p144
      $region42: #{sada_forward.3} parent=39 // pred_check_branch
        %1935 = sbr.rel (%p1933) target = $region44
      $region43: #{sada_forward.3} parent=39 // pred_region
        _
      $region44: #{sada_forward.3} parent=39 // pred_fallthru
        _
    $region40: #{sada_forward.3} parent=5 // pred_fallthru
      _
    %p1936 = scmp.le.s32.totalorder 2, %s11
    // Predicated region
    $region45: #{sada_forward.3} parent=5 // pred_check
      %p1937 = pneg %p1936
    $region46: #{sada_forward.3} parent=5 // pred_check_branch
      %1939 = sbr.rel (%p1937) target = $region48
    $region47: #{sada_forward.3} parent=5 // pred_region
      %s1940 = ssub.s32 %s11, 2
      // Predicated region
      $region49: #{sada_forward.3} parent=47 // pred_check
        %p1941 = pneg %p150
      $region50: #{sada_forward.3} parent=47 // pred_check_branch
        %1943 = sbr.rel (%p1941) target = $region52
      $region51: #{sada_forward.3} parent=47 // pred_region
        %p1944 = scmp.lt.s32.totalorder %s17, 1
        %s1945 = scalar_select %p1944, %s17, 1
        %s1946 = smul.addr %s1945, 4
        %s1947 = smul.addr %s1946, 4
        %s1948 = scalar_lea.vmem %s5, %s1947
      $region52: #{sada_forward.3} parent=47 // pred_fallthru
        _
    $region48: #{sada_forward.3} parent=5 // pred_fallthru
      _
  $region6: #{sada_forward.3} parent=0 // loop_footer
    %s15 = sadd.s32 1, %s11
  $region7: #{sada_forward.3} parent=0 // loop_footer_branch
    %10 = sbr.rel target = $region3
  $region8: #{sada_forward.3} parent=0 // loop_exit
    _

</llo_original>
